<compile_context>
chip_gen: v5e
topology: v5e:2x2
jax: 0.10.0
libtpu: 0.0.40
codegen_flags: <defaults>
</compile_context>

<pallas_src>
import jax
import jax.numpy as jnp
from jax.experimental import pallas as pl
from jax.experimental.pallas import tpu as pltpu


def _double_conv_kernel(x_ref, w1_ref, s1_ref, b1_ref, w2_ref, s2_ref, b2_ref,
                        o_ref):
    """Fused (conv3x3 + BN + ReLU) x 2 for one batch element / H row-tile.

    x_ref:  (1, H, W, Cin)        bf16  (whole image; halo rows sliced in-kernel)
    w1_ref: (3, 3*Cin, Cmid)      bf16  (dy-major, (dx, cin) folded into K)
    s1/b1:  (1, Cmid)             f32   (folded BN1 scale / bias incl. conv bias)
    w2_ref: (3, 3*Cmid, Cout)     bf16
    s2/b2:  (1, Cout)             f32
    o_ref:  (1, TILE_H, W, Cout)  f32
    """
    t = pl.program_id(1)
    n_tiles = pl.num_programs(1)
    tile_h = o_ref.shape[1]
    W = o_ref.shape[2]
    cout = o_ref.shape[3]
    H = x_ref.shape[1]
    cin = x_ref.shape[3]
    cmid = s1_ref.shape[1]
    act_dtype = x_ref.dtype

    h0 = pl.multiple_of(t * tile_h, tile_h)

    # ---- gather tile_h + 4 input rows (2-row halo each side); rows outside
    # the image (conv zero padding) are masked to zero.  All reads stay
    # in-bounds via clamped starts; masking happens after the read.
    top = x_ref[0, pl.ds(jnp.maximum(h0 - 2, 0), 2), :, :]            # (2, W, cin)
    body = x_ref[0, pl.ds(h0, tile_h), :, :]                          # (tile_h, W, cin)
    bot = x_ref[0, pl.ds(jnp.minimum(h0 + tile_h, H - 2), 2), :, :]   # (2, W, cin)
    top = jnp.where(t > 0, top, jnp.zeros_like(top))
    bot = jnp.where(t < n_tiles - 1, bot, jnp.zeros_like(bot))
    xs = jnp.concatenate([top, body, bot], axis=0)                    # (tile_h+4, W, cin)

    def cat_w_taps(a):
        """(R, W, C) -> (R, W, 3C): columns w-1, w, w+1 (zero outside image)."""
        r, w, c = a.shape
        z = jnp.zeros((r, 1, c), a.dtype)
        left = jnp.concatenate([z, a[:, :w - 1, :]], axis=1)    # col w-1
        right = jnp.concatenate([a[:, 1:, :], z], axis=1)       # col w+1
        return jnp.concatenate([left, a, right], axis=-1)

    def conv3x3(taps, w_ref_, rows_out, k3):
        """taps: (rows_out+2, W, 3C); w_ref_: (3, 3C, Co) -> (rows_out*W, Co) f32."""
        acc = jnp.zeros((rows_out * W, w_ref_.shape[2]), jnp.float32)
        for dy in range(3):
            patch = taps[dy:dy + rows_out].reshape(rows_out * W, k3)
            acc = acc + jnp.dot(patch, w_ref_[dy],
                                preferred_element_type=jnp.float32)
        return acc

    # ---- stage 1: conv1 + BN1 + ReLU over tile_h + 2 rows (1-row halo for conv2)
    r1 = tile_h + 2
    acc1 = conv3x3(cat_w_taps(xs), w1_ref, r1, 3 * cin)
    mid = jnp.maximum(acc1 * s1_ref[0] + b1_ref[0], 0.0)              # f32
    mid = mid.reshape(r1, W, cmid)
    # Halo rows that fall outside the image act as conv2's zero padding.
    first = jnp.where(t > 0, mid[0:1], jnp.zeros_like(mid[0:1]))
    last = jnp.where(t < n_tiles - 1, mid[r1 - 1:r1], jnp.zeros_like(mid[0:1]))
    mid = jnp.concatenate([first, mid[1:r1 - 1], last], axis=0).astype(act_dtype)

    # ---- stage 2: conv2 + BN2 + ReLU over the tile_h output rows
    acc2 = conv3x3(cat_w_taps(mid), w2_ref, tile_h, 3 * cmid)
    y = jnp.maximum(acc2 * s2_ref[0] + b2_ref[0], 0.0)
    o_ref[0] = y.reshape(tile_h, W, cout).astype(o_ref.dtype)


def _fold_bn(conv_bias, gamma, beta, running_mean, running_var, eps=1e-5):
    scale = gamma / jnp.sqrt(running_var + eps)
    bias = beta + scale * (conv_bias - running_mean)
    return scale.astype(jnp.float32), bias.astype(jnp.float32)


def _pick_tile_h(H, cap=8):
    """Largest divisor of H that is <= cap and >= 2 (else a single tile)."""
    for d in range(min(H, cap), 1, -1):
        if H % d == 0:
            return d
    return H


def double_conv_forward(x_nchw, params):
    """DoubleConv forward.  x_nchw: (N, Cin, H, W) float32 (PyTorch layout)."""
    N, Cin, H, W = x_nchw.shape
    cmid = params["w1"].shape[-1]
    cout = params["w2"].shape[-1]

    # NCHW -> NHWC (channels on lanes); bf16 activations for the MXU.
    x = jnp.transpose(x_nchw, (0, 2, 3, 1)).astype(jnp.bfloat16)

    # Fold BN (eval mode) + conv bias into per-channel scale / bias (f32).
    s1, b1 = _fold_bn(params["b1"], params["gamma1"], params["beta1"],
                      params["mean1"], params["var1"])
    s2, b2 = _fold_bn(params["b2"], params["gamma2"], params["beta2"],
                      params["mean2"], params["var2"])

    # Pre-reshape weights: (3, 3, C, Co) -> (3, 3*C, Co), dy-major.
    w1c = params["w1"].reshape(3, 3 * Cin, cmid).astype(jnp.bfloat16)
    w2c = params["w2"].reshape(3, 3 * cmid, cout).astype(jnp.bfloat16)

    tile_h = _pick_tile_h(H)
    n_tiles = H // tile_h

    flops = 2 * N * H * W * 9 * (Cin * cmid + cmid * cout)
    bytes_accessed = (x.size * 2 + w1c.size * 2 + w2c.size * 2
                      + 2 * (cmid + cout) * 4 + N * H * W * cout * 4)

    out = pl.pallas_call(
        _double_conv_kernel,
        out_shape=jax.ShapeDtypeStruct((N, H, W, cout), jnp.float32),
        grid_spec=pltpu.PrefetchScalarGridSpec(
            num_scalar_prefetch=0,
            grid=(N, n_tiles),
            in_specs=[
                # Whole image per batch element; block index is constant in the
                # H-tile axis, so it is re-fetched only when `n` changes.
                pl.BlockSpec((1, H, W, Cin), lambda n, t: (n, 0, 0, 0)),
                pl.BlockSpec((3, 3 * Cin, cmid), lambda n, t: (0, 0, 0)),
                pl.BlockSpec((1, cmid), lambda n, t: (0, 0)),
                pl.BlockSpec((1, cmid), lambda n, t: (0, 0)),
                pl.BlockSpec((3, 3 * cmid, cout), lambda n, t: (0, 0, 0)),
                pl.BlockSpec((1, cout), lambda n, t: (0, 0)),
                pl.BlockSpec((1, cout), lambda n, t: (0, 0)),
            ],
            out_specs=pl.BlockSpec((1, tile_h, W, cout),
                                   lambda n, t: (n, t, 0, 0)),
        ),
        compiler_params=pltpu.CompilerParams(
            dimension_semantics=("parallel", "parallel"),
            vmem_limit_bytes=32 * 1024 * 1024),
        cost_estimate=pl.CostEstimate(flops=flops, transcendentals=0,
                                      bytes_accessed=bytes_accessed),
    )(x, w1c, s1.reshape(1, cmid), b1.reshape(1, cmid),
      w2c, s2.reshape(1, cout), b2.reshape(1, cout))

    return jnp.transpose(out, (0, 3, 1, 2))  # -> NCHW, f32


def init_params(key, in_channels, out_channels):
    """Deterministic synthetic parameters (PyTorch shapes, converted to HWIO)."""
    ks = jax.random.split(key, 10)

    def conv_w(k, cin, cout):
        # PyTorch weight (Cout, Cin, 3, 3) -> kernel layout (3, 3, Cin, Cout)
        w_oihw = jax.random.normal(k, (cout, cin, 3, 3), jnp.float32) * 0.1
        return jnp.transpose(w_oihw, (2, 3, 1, 0))

    return {
        "w1": conv_w(ks[0], in_channels, out_channels),
        "b1": jax.random.normal(ks[1], (out_channels,), jnp.float32) * 0.1,
        "gamma1": 1.0 + 0.1 * jax.random.normal(ks[2], (out_channels,), jnp.float32),
        "beta1": 0.1 * jax.random.normal(ks[3], (out_channels,), jnp.float32),
        "mean1": 0.05 * jax.random.normal(ks[4], (out_channels,), jnp.float32),
        "var1": 1.0 + 0.1 * jax.random.uniform(ks[5], (out_channels,), jnp.float32),
        "w2": conv_w(ks[6], out_channels, out_channels),
        "b2": jax.random.normal(ks[7], (out_channels,), jnp.float32) * 0.1,
        "gamma2": 1.0 + 0.1 * jax.random.normal(ks[8], (out_channels,), jnp.float32),
        "beta2": 0.1 * jax.random.normal(ks[9], (out_channels,), jnp.float32),
        "mean2": jnp.zeros((out_channels,), jnp.float32),
        "var2": jnp.ones((out_channels,), jnp.float32),
    }


def _reference(x_nchw, params):
    """Pure-JAX reference (lax.conv), mirroring the kernel's bf16 MXU inputs."""
    def conv_bn_relu(x, w_hwio, bias, gamma, beta, mean, var, eps=1e-5):
        w_oihw = jnp.transpose(w_hwio, (3, 2, 0, 1)).astype(jnp.bfloat16)
        y = jax.lax.conv_general_dilated(
            x.astype(jnp.bfloat16), w_oihw, window_strides=(1, 1),
            padding=((1, 1), (1, 1)),
            dimension_numbers=("NCHW", "OIHW", "NCHW"),
            preferred_element_type=jnp.float32)
        y = y + bias[None, :, None, None]
        y = (y - mean[None, :, None, None]) / jnp.sqrt(var + eps)[None, :, None, None]
        y = gamma[None, :, None, None] * y + beta[None, :, None, None]
        return jnp.maximum(y, 0.0)

    y = conv_bn_relu(x_nchw, params["w1"], params["b1"], params["gamma1"],
                     params["beta1"], params["mean1"], params["var1"])
    y = conv_bn_relu(y, params["w2"], params["b2"], params["gamma2"],
                     params["beta2"], params["mean2"], params["var2"])
    return y


if __name__ == "__main__":
    key = jax.random.PRNGKey(0)
    k_x, k_p = jax.random.split(key)

    N, Cin, Cout, H, W = 2, 4, 8, 16, 16
    x = jax.random.normal(k_x, (N, Cin, H, W), jnp.float32)
    params = init_params(k_p, Cin, Cout)

    out = jax.block_until_ready(double_conv_forward(x, params))
    ref = jax.block_until_ready(_reference(x, params))

    assert out.shape == (N, Cout, H, W), out.shape
    max_err = float(jnp.max(jnp.abs(out - ref)))
    assert jnp.allclose(out, ref, atol=1e-2, rtol=1e-2), max_err

    print("KERNEL_OK")
</pallas_src>

<mosaic_0001>
module attributes {stable_mosaic.version = 11 : i64} {
  func.func @_double_conv_kernel(%arg0: i32, %arg1: i32, %arg2: memref<1x16x16x4xbf16, #tpu.memory_space<vmem>>, %arg3: memref<3x12x8xbf16, #tpu.memory_space<vmem>>, %arg4: memref<1x8xf32, #tpu.memory_space<vmem>>, %arg5: memref<1x8xf32, #tpu.memory_space<vmem>>, %arg6: memref<3x24x8xbf16, #tpu.memory_space<vmem>>, %arg7: memref<1x8xf32, #tpu.memory_space<vmem>>, %arg8: memref<1x8xf32, #tpu.memory_space<vmem>>, %arg9: memref<1x8x16x8xf32, #tpu.memory_space<vmem>>) attributes {dimension_semantics = [#tpu.dimension_semantics<parallel>, #tpu.dimension_semantics<parallel>], iteration_bounds = array<i64: 2, 2>, scalar_prefetch = 0 : i64, scratch_operands = 0 : i64, tpu.core_type = #tpu.core_type<tc>, window_params = [{transform_indices = @transform_0, window_bounds = array<i64: 1, 16, 16, 4>}, {pipeline_mode = #tpu.pipeline_mode<synchronous>, transform_indices = @transform_1, window_bounds = array<i64: 3, 12, 8>}, {pipeline_mode = #tpu.pipeline_mode<synchronous>, transform_indices = @transform_2, window_bounds = array<i64: 1, 8>}, {pipeline_mode = #tpu.pipeline_mode<synchronous>, transform_indices = @transform_3, window_bounds = array<i64: 1, 8>}, {pipeline_mode = #tpu.pipeline_mode<synchronous>, transform_indices = @transform_4, window_bounds = array<i64: 3, 24, 8>}, {pipeline_mode = #tpu.pipeline_mode<synchronous>, transform_indices = @transform_5, window_bounds = array<i64: 1, 8>}, {pipeline_mode = #tpu.pipeline_mode<synchronous>, transform_indices = @transform_6, window_bounds = array<i64: 1, 8>}, {transform_indices = @transform_7, window_bounds = array<i64: 1, 8, 16, 8>}]} {
    %c8_i32 = arith.constant 8 : i32
    %0 = arith.muli %arg1, %c8_i32 : i32
    %1 = tpu.assume_multiple %0, 8 : i32
    %c2_i32 = arith.constant 2 : i32
    %2 = arith.subi %1, %c2_i32 : i32
    %c0_i32 = arith.constant 0 : i32
    %3 = arith.maxsi %2, %c0_i32 : i32
    %c0 = arith.constant 0 : index
    %4 = arith.index_cast %3 : i32 to index
    %c0_0 = arith.constant 0 : index
    %c0_1 = arith.constant 0 : index
    %5 = vector.load %arg2[%c0, %4, %c0_0, %c0_1] : memref<1x16x16x4xbf16, #tpu.memory_space<vmem>>, vector<1x2x16x4xbf16>
    %6 = vector.shape_cast %5 : vector<1x2x16x4xbf16> to vector<2x16x4xbf16>
    %c0_2 = arith.constant 0 : index
    %7 = arith.index_cast %1 : i32 to index
    %c0_3 = arith.constant 0 : index
    %c0_4 = arith.constant 0 : index
    %8 = vector.load %arg2[%c0_2, %7, %c0_3, %c0_4] : memref<1x16x16x4xbf16, #tpu.memory_space<vmem>>, vector<1x8x16x4xbf16>
    %9 = vector.shape_cast %8 : vector<1x8x16x4xbf16> to vector<8x16x4xbf16>
    %c8_i32_5 = arith.constant 8 : i32
    %10 = arith.addi %1, %c8_i32_5 : i32
    %c14_i32 = arith.constant 14 : i32
    %11 = arith.minsi %10, %c14_i32 : i32
    %c0_6 = arith.constant 0 : index
    %12 = arith.index_cast %11 : i32 to index
    %c0_7 = arith.constant 0 : index
    %c0_8 = arith.constant 0 : index
    %13 = vector.load %arg2[%c0_6, %12, %c0_7, %c0_8] : memref<1x16x16x4xbf16, #tpu.memory_space<vmem>>, vector<1x2x16x4xbf16>
    %14 = vector.shape_cast %13 : vector<1x2x16x4xbf16> to vector<2x16x4xbf16>
    %c0_i32_9 = arith.constant 0 : i32
    %15 = arith.cmpi sgt, %arg1, %c0_i32_9 : i32
    %cst = arith.constant 0.000000e+00 : bf16
    %16 = vector.broadcast %cst : bf16 to vector<2x16x4xbf16>
    %17 = arith.select %15, %6, %16 : vector<2x16x4xbf16>
    %c1_i32 = arith.constant 1 : i32
    %18 = arith.cmpi slt, %arg1, %c1_i32 : i32
    %cst_10 = arith.constant 0.000000e+00 : bf16
    %19 = vector.broadcast %cst_10 : bf16 to vector<2x16x4xbf16>
    %20 = arith.select %18, %14, %19 : vector<2x16x4xbf16>
    %21 = tpu.concatenate %17, %9, %20 in 0 : vector<2x16x4xbf16>, vector<8x16x4xbf16>, vector<2x16x4xbf16> -> vector<12x16x4xbf16>
    %cst_11 = arith.constant 0.000000e+00 : bf16
    %22 = vector.broadcast %cst_11 : bf16 to vector<12x1x4xbf16>
    %23 = vector.extract_strided_slice %21 {offsets = [0, 0, 0], sizes = [12, 15, 4], strides = [1, 1, 1]} : vector<12x16x4xbf16> to vector<12x15x4xbf16>
    %24 = tpu.concatenate %22, %23 in 1 : vector<12x1x4xbf16>, vector<12x15x4xbf16> -> vector<12x16x4xbf16>
    %25 = vector.extract_strided_slice %21 {offsets = [0, 1, 0], sizes = [12, 15, 4], strides = [1, 1, 1]} : vector<12x16x4xbf16> to vector<12x15x4xbf16>
    %26 = tpu.concatenate %25, %22 in 1 : vector<12x15x4xbf16>, vector<12x1x4xbf16> -> vector<12x16x4xbf16>
    %27 = tpu.concatenate %24, %21, %26 in 2 : vector<12x16x4xbf16>, vector<12x16x4xbf16>, vector<12x16x4xbf16> -> vector<12x16x12xbf16>
    %cst_12 = arith.constant 0.000000e+00 : f32
    %28 = vector.broadcast %cst_12 : f32 to vector<160x8xf32>
    %29 = vector.extract_strided_slice %27 {offsets = [0, 0, 0], sizes = [10, 16, 12], strides = [1, 1, 1]} : vector<12x16x12xbf16> to vector<10x16x12xbf16>
    %30 = vector.shape_cast %29 : vector<10x16x12xbf16> to vector<160x12xbf16>
    %c0_13 = arith.constant 0 : index
    %c0_14 = arith.constant 0 : index
    %c0_15 = arith.constant 0 : index
    %31 = vector.load %arg3[%c0_13, %c0_14, %c0_15] : memref<3x12x8xbf16, #tpu.memory_space<vmem>>, vector<1x12x8xbf16>
    %32 = vector.shape_cast %31 : vector<1x12x8xbf16> to vector<12x8xbf16>
    %cst_16 = arith.constant dense<0.000000e+00> : vector<160x8xf32>
    %33 = tpu.matmul %30, %32, %cst_16 {dimension_numbers = #tpu.dot_dimension_numbers<[1], [0], [0], [1], [0, 0, 1, 1], [], []>} : vector<160x12xbf16>, vector<12x8xbf16>, vector<160x8xf32> -> vector<160x8xf32>
    %34 = arith.addf %28, %33 : vector<160x8xf32>
    %35 = vector.extract_strided_slice %27 {offsets = [1, 0, 0], sizes = [10, 16, 12], strides = [1, 1, 1]} : vector<12x16x12xbf16> to vector<10x16x12xbf16>
    %36 = vector.shape_cast %35 : vector<10x16x12xbf16> to vector<160x12xbf16>
    %c1 = arith.constant 1 : index
    %c0_17 = arith.constant 0 : index
    %c0_18 = arith.constant 0 : index
    %37 = vector.load %arg3[%c1, %c0_17, %c0_18] : memref<3x12x8xbf16, #tpu.memory_space<vmem>>, vector<1x12x8xbf16>
    %38 = vector.shape_cast %37 : vector<1x12x8xbf16> to vector<12x8xbf16>
    %cst_19 = arith.constant dense<0.000000e+00> : vector<160x8xf32>
    %39 = tpu.matmul %36, %38, %cst_19 {dimension_numbers = #tpu.dot_dimension_numbers<[1], [0], [0], [1], [0, 0, 1, 1], [], []>} : vector<160x12xbf16>, vector<12x8xbf16>, vector<160x8xf32> -> vector<160x8xf32>
    %40 = arith.addf %34, %39 : vector<160x8xf32>
    %41 = vector.extract_strided_slice %27 {offsets = [2, 0, 0], sizes = [10, 16, 12], strides = [1, 1, 1]} : vector<12x16x12xbf16> to vector<10x16x12xbf16>
    %42 = vector.shape_cast %41 : vector<10x16x12xbf16> to vector<160x12xbf16>
    %c2 = arith.constant 2 : index
    %c0_20 = arith.constant 0 : index
    %c0_21 = arith.constant 0 : index
    %43 = vector.load %arg3[%c2, %c0_20, %c0_21] : memref<3x12x8xbf16, #tpu.memory_space<vmem>>, vector<1x12x8xbf16>
    %44 = vector.shape_cast %43 : vector<1x12x8xbf16> to vector<12x8xbf16>
    %cst_22 = arith.constant dense<0.000000e+00> : vector<160x8xf32>
    %45 = tpu.matmul %42, %44, %cst_22 {dimension_numbers = #tpu.dot_dimension_numbers<[1], [0], [0], [1], [0, 0, 1, 1], [], []>} : vector<160x12xbf16>, vector<12x8xbf16>, vector<160x8xf32> -> vector<160x8xf32>
    %46 = arith.addf %40, %45 : vector<160x8xf32>
    %c0_23 = arith.constant 0 : index
    %c0_24 = arith.constant 0 : index
    %47 = vector.load %arg4[%c0_23, %c0_24] : memref<1x8xf32, #tpu.memory_space<vmem>>, vector<1x8xf32>
    %48 = vector.shape_cast %47 : vector<1x8xf32> to vector<8xf32>
    %49 = vector.shape_cast %48 : vector<8xf32> to vector<1x8xf32>
    %50 = vector.broadcast %49 : vector<1x8xf32> to vector<160x8xf32>
    %51 = arith.mulf %46, %50 : vector<160x8xf32>
    %c0_25 = arith.constant 0 : index
    %c0_26 = arith.constant 0 : index
    %52 = vector.load %arg5[%c0_25, %c0_26] : memref<1x8xf32, #tpu.memory_space<vmem>>, vector<1x8xf32>
    %53 = vector.shape_cast %52 : vector<1x8xf32> to vector<8xf32>
    %54 = vector.shape_cast %53 : vector<8xf32> to vector<1x8xf32>
    %55 = vector.broadcast %54 : vector<1x8xf32> to vector<160x8xf32>
    %56 = arith.addf %51, %55 : vector<160x8xf32>
    %cst_27 = arith.constant 0.000000e+00 : f32
    %57 = vector.broadcast %cst_27 : f32 to vector<160x8xf32>
    %58 = arith.maximumf %56, %57 : vector<160x8xf32>
    %59 = vector.shape_cast %58 : vector<160x8xf32> to vector<10x16x8xf32>
    %c0_i32_28 = arith.constant 0 : i32
    %60 = arith.cmpi sgt, %arg1, %c0_i32_28 : i32
    %61 = vector.extract_strided_slice %59 {offsets = [0, 0, 0], sizes = [1, 16, 8], strides = [1, 1, 1]} : vector<10x16x8xf32> to vector<1x16x8xf32>
    %cst_29 = arith.constant 0.000000e+00 : f32
    %62 = vector.broadcast %cst_29 : f32 to vector<1x16x8xf32>
    %63 = arith.select %60, %61, %62 : vector<1x16x8xf32>
    %c1_i32_30 = arith.constant 1 : i32
    %64 = arith.cmpi slt, %arg1, %c1_i32_30 : i32
    %65 = vector.extract_strided_slice %59 {offsets = [9, 0, 0], sizes = [1, 16, 8], strides = [1, 1, 1]} : vector<10x16x8xf32> to vector<1x16x8xf32>
    %cst_31 = arith.constant 0.000000e+00 : f32
    %66 = vector.broadcast %cst_31 : f32 to vector<1x16x8xf32>
    %67 = arith.select %64, %65, %66 : vector<1x16x8xf32>
    %68 = vector.extract_strided_slice %59 {offsets = [1, 0, 0], sizes = [8, 16, 8], strides = [1, 1, 1]} : vector<10x16x8xf32> to vector<8x16x8xf32>
    %69 = tpu.concatenate %63, %68, %67 in 0 : vector<1x16x8xf32>, vector<8x16x8xf32>, vector<1x16x8xf32> -> vector<10x16x8xf32>
    %70 = arith.truncf %69 : vector<10x16x8xf32> to vector<10x16x8xbf16>
    %cst_32 = arith.constant 0.000000e+00 : bf16
    %71 = vector.broadcast %cst_32 : bf16 to vector<10x1x8xbf16>
    %72 = vector.extract_strided_slice %70 {offsets = [0, 0, 0], sizes = [10, 15, 8], strides = [1, 1, 1]} : vector<10x16x8xbf16> to vector<10x15x8xbf16>
    %73 = tpu.concatenate %71, %72 in 1 : vector<10x1x8xbf16>, vector<10x15x8xbf16> -> vector<10x16x8xbf16>
    %74 = vector.extract_strided_slice %70 {offsets = [0, 1, 0], sizes = [10, 15, 8], strides = [1, 1, 1]} : vector<10x16x8xbf16> to vector<10x15x8xbf16>
    %75 = tpu.concatenate %74, %71 in 1 : vector<10x15x8xbf16>, vector<10x1x8xbf16> -> vector<10x16x8xbf16>
    %76 = tpu.concatenate %73, %70, %75 in 2 : vector<10x16x8xbf16>, vector<10x16x8xbf16>, vector<10x16x8xbf16> -> vector<10x16x24xbf16>
    %cst_33 = arith.constant 0.000000e+00 : f32
    %77 = vector.broadcast %cst_33 : f32 to vector<128x8xf32>
    %78 = vector.extract_strided_slice %76 {offsets = [0, 0, 0], sizes = [8, 16, 24], strides = [1, 1, 1]} : vector<10x16x24xbf16> to vector<8x16x24xbf16>
    %79 = vector.shape_cast %78 : vector<8x16x24xbf16> to vector<128x24xbf16>
    %c0_34 = arith.constant 0 : index
    %c0_35 = arith.constant 0 : index
    %c0_36 = arith.constant 0 : index
    %80 = vector.load %arg6[%c0_34, %c0_35, %c0_36] : memref<3x24x8xbf16, #tpu.memory_space<vmem>>, vector<1x24x8xbf16>
    %81 = vector.shape_cast %80 : vector<1x24x8xbf16> to vector<24x8xbf16>
    %cst_37 = arith.constant dense<0.000000e+00> : vector<128x8xf32>
    %82 = tpu.matmul %79, %81, %cst_37 {dimension_numbers = #tpu.dot_dimension_numbers<[1], [0], [0], [1], [0, 0, 1, 1], [], []>} : vector<128x24xbf16>, vector<24x8xbf16>, vector<128x8xf32> -> vector<128x8xf32>
    %83 = arith.addf %77, %82 : vector<128x8xf32>
    %84 = vector.extract_strided_slice %76 {offsets = [1, 0, 0], sizes = [8, 16, 24], strides = [1, 1, 1]} : vector<10x16x24xbf16> to vector<8x16x24xbf16>
    %85 = vector.shape_cast %84 : vector<8x16x24xbf16> to vector<128x24xbf16>
    %c1_38 = arith.constant 1 : index
    %c0_39 = arith.constant 0 : index
    %c0_40 = arith.constant 0 : index
    %86 = vector.load %arg6[%c1_38, %c0_39, %c0_40] : memref<3x24x8xbf16, #tpu.memory_space<vmem>>, vector<1x24x8xbf16>
    %87 = vector.shape_cast %86 : vector<1x24x8xbf16> to vector<24x8xbf16>
    %cst_41 = arith.constant dense<0.000000e+00> : vector<128x8xf32>
    %88 = tpu.matmul %85, %87, %cst_41 {dimension_numbers = #tpu.dot_dimension_numbers<[1], [0], [0], [1], [0, 0, 1, 1], [], []>} : vector<128x24xbf16>, vector<24x8xbf16>, vector<128x8xf32> -> vector<128x8xf32>
    %89 = arith.addf %83, %88 : vector<128x8xf32>
    %90 = vector.extract_strided_slice %76 {offsets = [2, 0, 0], sizes = [8, 16, 24], strides = [1, 1, 1]} : vector<10x16x24xbf16> to vector<8x16x24xbf16>
    %91 = vector.shape_cast %90 : vector<8x16x24xbf16> to vector<128x24xbf16>
    %c2_42 = arith.constant 2 : index
    %c0_43 = arith.constant 0 : index
    %c0_44 = arith.constant 0 : index
    %92 = vector.load %arg6[%c2_42, %c0_43, %c0_44] : memref<3x24x8xbf16, #tpu.memory_space<vmem>>, vector<1x24x8xbf16>
    %93 = vector.shape_cast %92 : vector<1x24x8xbf16> to vector<24x8xbf16>
    %cst_45 = arith.constant dense<0.000000e+00> : vector<128x8xf32>
    %94 = tpu.matmul %91, %93, %cst_45 {dimension_numbers = #tpu.dot_dimension_numbers<[1], [0], [0], [1], [0, 0, 1, 1], [], []>} : vector<128x24xbf16>, vector<24x8xbf16>, vector<128x8xf32> -> vector<128x8xf32>
    %95 = arith.addf %89, %94 : vector<128x8xf32>
    %c0_46 = arith.constant 0 : index
    %c0_47 = arith.constant 0 : index
    %96 = vector.load %arg7[%c0_46, %c0_47] : memref<1x8xf32, #tpu.memory_space<vmem>>, vector<1x8xf32>
    %97 = vector.shape_cast %96 : vector<1x8xf32> to vector<8xf32>
    %98 = vector.shape_cast %97 : vector<8xf32> to vector<1x8xf32>
    %99 = vector.broadcast %98 : vector<1x8xf32> to vector<128x8xf32>
    %100 = arith.mulf %95, %99 : vector<128x8xf32>
    %c0_48 = arith.constant 0 : index
    %c0_49 = arith.constant 0 : index
    %101 = vector.load %arg8[%c0_48, %c0_49] : memref<1x8xf32, #tpu.memory_space<vmem>>, vector<1x8xf32>
    %102 = vector.shape_cast %101 : vector<1x8xf32> to vector<8xf32>
    %103 = vector.shape_cast %102 : vector<8xf32> to vector<1x8xf32>
    %104 = vector.broadcast %103 : vector<1x8xf32> to vector<128x8xf32>
    %105 = arith.addf %100, %104 : vector<128x8xf32>
    %cst_50 = arith.constant 0.000000e+00 : f32
    %106 = vector.broadcast %cst_50 : f32 to vector<128x8xf32>
    %107 = arith.maximumf %105, %106 : vector<128x8xf32>
    %108 = vector.shape_cast %107 : vector<128x8xf32> to vector<8x16x8xf32>
    %c0_51 = arith.constant 0 : index
    %c0_52 = arith.constant 0 : index
    %c0_53 = arith.constant 0 : index
    %c0_54 = arith.constant 0 : index
    %109 = vector.load %arg9[%c0_51, %c0_52, %c0_53, %c0_54] : memref<1x8x16x8xf32, #tpu.memory_space<vmem>>, vector<1x8x16x8xf32>
    %110 = vector.shape_cast %109 : vector<1x8x16x8xf32> to vector<8x16x8xf32>
    %111 = vector.shape_cast %108 : vector<8x16x8xf32> to vector<1x8x16x8xf32>
    tpu.vector_store %arg9[%c0_51, %c0_52, %c0_53, %c0_54], %111 {strides = array<i32>} : memref<1x8x16x8xf32, #tpu.memory_space<vmem>>, vector<1x8x16x8xf32>,
    return
  }
  func.func @transform_0(%arg0: i32, %arg1: i32) -> (i32, i32, i32, i32) {
    %c0_i32 = arith.constant 0 : i32
    %c0_i32_0 = arith.constant 0 : i32
    %c0_i32_1 = arith.constant 0 : i32
    %c0_i32_2 = arith.constant 0 : i32
    return %arg0, %c0_i32, %c0_i32_0, %c0_i32_1 : i32, i32, i32, i32
  }
  func.func @transform_1(%arg0: i32, %arg1: i32) -> (i32, i32, i32) {
    %c0_i32 = arith.constant 0 : i32
    %c0_i32_0 = arith.constant 0 : i32
    %c0_i32_1 = arith.constant 0 : i32
    %c0_i32_2 = arith.constant 0 : i32
    return %c0_i32, %c0_i32_0, %c0_i32_1 : i32, i32, i32
  }
  func.func @transform_2(%arg0: i32, %arg1: i32) -> (i32, i32) {
    %c0_i32 = arith.constant 0 : i32
    %c0_i32_0 = arith.constant 0 : i32
    %c0_i32_1 = arith.constant 0 : i32
    return %c0_i32, %c0_i32_0 : i32, i32
  }
  func.func @transform_3(%arg0: i32, %arg1: i32) -> (i32, i32) {
    %c0_i32 = arith.constant 0 : i32
    %c0_i32_0 = arith.constant 0 : i32
    %c0_i32_1 = arith.constant 0 : i32
    return %c0_i32, %c0_i32_0 : i32, i32
  }
  func.func @transform_4(%arg0: i32, %arg1: i32) -> (i32, i32, i32) {
    %c0_i32 = arith.constant 0 : i32
    %c0_i32_0 = arith.constant 0 : i32
    %c0_i32_1 = arith.constant 0 : i32
    %c0_i32_2 = arith.constant 0 : i32
    return %c0_i32, %c0_i32_0, %c0_i32_1 : i32, i32, i32
  }
  func.func @transform_5(%arg0: i32, %arg1: i32) -> (i32, i32) {
    %c0_i32 = arith.constant 0 : i32
    %c0_i32_0 = arith.constant 0 : i32
    %c0_i32_1 = arith.constant 0 : i32
    return %c0_i32, %c0_i32_0 : i32, i32
  }
  func.func @transform_6(%arg0: i32, %arg1: i32) -> (i32, i32) {
    %c0_i32 = arith.constant 0 : i32
    %c0_i32_0 = arith.constant 0 : i32
    %c0_i32_1 = arith.constant 0 : i32
    return %c0_i32, %c0_i32_0 : i32, i32
  }
  func.func @transform_7(%arg0: i32, %arg1: i32) -> (i32, i32, i32, i32) {
    %c0_i32 = arith.constant 0 : i32
    %c0_i32_0 = arith.constant 0 : i32
    %c0_i32_1 = arith.constant 0 : i32
    return %arg0, %arg1, %c0_i32, %c0_i32_0 : i32, i32, i32, i32
  }
}

</mosaic_0001>

<llo_original>
// kernel: tpu_custom_call.1
$region0: #{tpu_custom_call.1}
  #allocation0 [shape = 'u32[]', space=smem, size = 0x4, offset = 0x4, fixed_abs, tag = 'smem constant byte address 0x4 - core index']
  #allocation1 [shape = 'u32[72,128]{1,0:T(1,128)}', space=vmem, size = 0x9000, scoped, tag = 'internal scratch']
  %s0 = inlined_call_operand.vmem [shape: bf16[2,16,16,4], index: 0, kind: input, shape index: {}]
  %s1 = inlined_call_operand.vmem [shape: bf16[3,12,8], index: 1, kind: input, shape index: {}]
  %s2 = inlined_call_operand.vmem [shape: f32[1,8], index: 2, kind: input, shape index: {}]
  %s3 = inlined_call_operand.vmem [shape: f32[1,8], index: 3, kind: input, shape index: {}]
  %s4 = inlined_call_operand.vmem [shape: bf16[3,24,8], index: 4, kind: input, shape index: {}]
  %s5 = inlined_call_operand.vmem [shape: f32[1,8], index: 5, kind: input, shape index: {}]
  %s6 = inlined_call_operand.vmem [shape: f32[1,8], index: 6, kind: input, shape index: {}]
  %s7 = inlined_call_operand.vmem [shape: f32[2,16,16,8], index: 7, kind: output, shape index: {}]
  %s8 = sld [smem:[#allocation0]]
  $region61: #{tpu_custom_call.1} parent=0
    _
  %s10 = ssub.s32 1, %s8
  %s11 = scalar_select 0, %s10, %s8
  loop: start=0, step=1, limit=6
  $region2: #{tpu_custom_call.1} parent=0 // loop_pre_header
    _
  $region3: #{tpu_custom_call.1} parent=0 // loop_header
    %s13 = sphi 0, %s17
    %p14 = scmp.ge.s32.totalorder %s13, 6
    %s20 = sphi 0, %s32
    %s21 = sphi 0, %s28
    %s22 = sphi 0, %s20
    %s23 = sphi 0, %s21
    %s24 = sphi 0, %s22
    %s25 = sphi 0, %s23
    %s35 = sphi 0, %s37
    %s38 = sphi 0, %s35
    %s39 = sphi 0, %s38
    %s55 = sphi 0, %s39
    %s59 = sphi 0, %s59
    %s61 = sphi 0, %s59
    %s62 = sphi 0, %s61
    %s76 = sphi 0, %s62
    %s80 = sphi 0, %s80
    %s82 = sphi 0, %s80
    %s83 = sphi 0, %s82
    %s97 = sphi 0, %s83
    %s101 = sphi 0, %s101
    %s103 = sphi 0, %s101
    %s104 = sphi 0, %s103
    %s118 = sphi 0, %s104
    %s122 = sphi 0, %s122
    %s124 = sphi 0, %s122
    %s125 = sphi 0, %s124
    %s139 = sphi 0, %s125
    %s143 = sphi 0, %s143
    %s145 = sphi 0, %s143
    %s146 = sphi 0, %s145
    %s160 = sphi 0, %s146
    %s164 = sphi 0, %s164
    %s166 = sphi 0, %s164
    %s167 = sphi 0, %s166
    %s181 = sphi 0, %s167
    %s189 = sphi 0, %s191
    %s192 = sphi 0, %s189
    %s193 = sphi 0, %s192
    %s209 = sphi 0, %s193
  $region4: #{tpu_custom_call.1} parent=0 // loop_header_branch
    %16 = sbr.rel (%p14) target = $region8
  $region5: #{tpu_custom_call.1} parent=0 // loop_body
    %s18 = ssub.s32 %s13, 1
    %s19 = ssub.s32 %s13, 2
    %s26 = sadd.s32 1, %s21
    %p27 = scmp.ge.s32.totalorder %s26, 2
    %s28 = scalar_select %p27, 0, %s26
    %s29 = sadd.s32 1, %s20
    %s30 = scalar_select %p27, %s29, %s20
    %p31 = scmp.ge.s32.totalorder %s30, 2
    %s32 = scalar_select %p31, 0, %s30
    %s33 = ssub.s32 %s20, %s32
    %p34 = scmp.eq.s32.totalorder %s33, 0
    %s36 = sadd.s32 %s35, 1
    %s37 = scalar_select %p34, %s35, %s36
    %p40 = pneg %p34
    %p41 = scmp.eq.s32.totalorder %s13, 3
    %p42 = por %p40, %p41
    %p43 = scmp.ne.s32.totalorder %s35, %s38
    %p44 = scmp.eq.s32.totalorder %s13, 0
    %p45 = por %p43, %p44
    %p46 = scmp.ne.s32.totalorder %s35, %s38
    %p47 = scmp.eq.s32.totalorder %s18, 3
    %p48 = por %p46, %p47
    %p49 = scmp.ne.s32.totalorder %s38, %s39
    %p50 = scmp.eq.s32.totalorder %s18, 0
    %p51 = por %p49, %p50
    %p52 = scmp.ne.s32.totalorder %s38, %s39
    %p53 = scmp.eq.s32.totalorder %s19, 3
    %p54 = por %p52, %p53
    %p56 = scmp.ne.s32.totalorder %s39, %s55
    %p57 = scmp.eq.s32.totalorder %s19, 0
    %p58 = por %p56, %p57
    %s60 = sadd.s32 %s59, 1
    %p63 = scmp.eq.s32.totalorder %s13, 3
    %p64 = scmp.ne.s32.totalorder %s59, %s61
    %p65 = scmp.eq.s32.totalorder %s13, 0
    %p66 = por %p64, %p65
    %p67 = scmp.ne.s32.totalorder %s59, %s61
    %p68 = scmp.eq.s32.totalorder %s18, 3
    %p69 = por %p67, %p68
    %p70 = scmp.ne.s32.totalorder %s61, %s62
    %p71 = scmp.eq.s32.totalorder %s18, 0
    %p72 = por %p70, %p71
    %p73 = scmp.ne.s32.totalorder %s61, %s62
    %p74 = scmp.eq.s32.totalorder %s19, 3
    %p75 = por %p73, %p74
    %p77 = scmp.ne.s32.totalorder %s62, %s76
    %p78 = scmp.eq.s32.totalorder %s19, 0
    %p79 = por %p77, %p78
    %s81 = sadd.s32 %s80, 1
    %p84 = scmp.eq.s32.totalorder %s13, 3
    %p85 = scmp.ne.s32.totalorder %s80, %s82
    %p86 = scmp.eq.s32.totalorder %s13, 0
    %p87 = por %p85, %p86
    %p88 = scmp.ne.s32.totalorder %s80, %s82
    %p89 = scmp.eq.s32.totalorder %s18, 3
    %p90 = por %p88, %p89
    %p91 = scmp.ne.s32.totalorder %s82, %s83
    %p92 = scmp.eq.s32.totalorder %s18, 0
    %p93 = por %p91, %p92
    %p94 = scmp.ne.s32.totalorder %s82, %s83
    %p95 = scmp.eq.s32.totalorder %s19, 3
    %p96 = por %p94, %p95
    %p98 = scmp.ne.s32.totalorder %s83, %s97
    %p99 = scmp.eq.s32.totalorder %s19, 0
    %p100 = por %p98, %p99
    %s102 = sadd.s32 %s101, 1
    %p105 = scmp.eq.s32.totalorder %s13, 3
    %p106 = scmp.ne.s32.totalorder %s101, %s103
    %p107 = scmp.eq.s32.totalorder %s13, 0
    %p108 = por %p106, %p107
    %p109 = scmp.ne.s32.totalorder %s101, %s103
    %p110 = scmp.eq.s32.totalorder %s18, 3
    %p111 = por %p109, %p110
    %p112 = scmp.ne.s32.totalorder %s103, %s104
    %p113 = scmp.eq.s32.totalorder %s18, 0
    %p114 = por %p112, %p113
    %p115 = scmp.ne.s32.totalorder %s103, %s104
    %p116 = scmp.eq.s32.totalorder %s19, 3
    %p117 = por %p115, %p116
    %p119 = scmp.ne.s32.totalorder %s104, %s118
    %p120 = scmp.eq.s32.totalorder %s19, 0
    %p121 = por %p119, %p120
    %s123 = sadd.s32 %s122, 1
    %p126 = scmp.eq.s32.totalorder %s13, 3
    %p127 = scmp.ne.s32.totalorder %s122, %s124
    %p128 = scmp.eq.s32.totalorder %s13, 0
    %p129 = por %p127, %p128
    %p130 = scmp.ne.s32.totalorder %s122, %s124
    %p131 = scmp.eq.s32.totalorder %s18, 3
    %p132 = por %p130, %p131
    %p133 = scmp.ne.s32.totalorder %s124, %s125
    %p134 = scmp.eq.s32.totalorder %s18, 0
    %p135 = por %p133, %p134
    %p136 = scmp.ne.s32.totalorder %s124, %s125
    %p137 = scmp.eq.s32.totalorder %s19, 3
    %p138 = por %p136, %p137
    %p140 = scmp.ne.s32.totalorder %s125, %s139
    %p141 = scmp.eq.s32.totalorder %s19, 0
    %p142 = por %p140, %p141
    %s144 = sadd.s32 %s143, 1
    %p147 = scmp.eq.s32.totalorder %s13, 3
    %p148 = scmp.ne.s32.totalorder %s143, %s145
    %p149 = scmp.eq.s32.totalorder %s13, 0
    %p150 = por %p148, %p149
    %p151 = scmp.ne.s32.totalorder %s143, %s145
    %p152 = scmp.eq.s32.totalorder %s18, 3
    %p153 = por %p151, %p152
    %p154 = scmp.ne.s32.totalorder %s145, %s146
    %p155 = scmp.eq.s32.totalorder %s18, 0
    %p156 = por %p154, %p155
    %p157 = scmp.ne.s32.totalorder %s145, %s146
    %p158 = scmp.eq.s32.totalorder %s19, 3
    %p159 = por %p157, %p158
    %p161 = scmp.ne.s32.totalorder %s146, %s160
    %p162 = scmp.eq.s32.totalorder %s19, 0
    %p163 = por %p161, %p162
    %s165 = sadd.s32 %s164, 1
    %p168 = scmp.eq.s32.totalorder %s13, 3
    %p169 = scmp.ne.s32.totalorder %s164, %s166
    %p170 = scmp.eq.s32.totalorder %s13, 0
    %p171 = por %p169, %p170
    %p172 = scmp.ne.s32.totalorder %s164, %s166
    %p173 = scmp.eq.s32.totalorder %s18, 3
    %p174 = por %p172, %p173
    %p175 = scmp.ne.s32.totalorder %s166, %s167
    %p176 = scmp.eq.s32.totalorder %s18, 0
    %p177 = por %p175, %p176
    %p178 = scmp.ne.s32.totalorder %s166, %s167
    %p179 = scmp.eq.s32.totalorder %s19, 3
    %p180 = por %p178, %p179
    %p182 = scmp.ne.s32.totalorder %s167, %s181
    %p183 = scmp.eq.s32.totalorder %s19, 0
    %p184 = por %p182, %p183
    %s185 = ssub.s32 %s20, %s32
    %s186 = ssub.s32 %s21, %s28
    %s187 = sor.u32 %s185, %s186
    %p188 = scmp.eq.s32.totalorder %s187, 0
    %s190 = sadd.s32 %s189, 1
    %s191 = scalar_select %p188, %s189, %s190
    %p194 = pneg %p188
    %p195 = scmp.eq.s32.totalorder %s13, 3
    %p196 = por %p194, %p195
    %p197 = scmp.ne.s32.totalorder %s189, %s192
    %p198 = scmp.eq.s32.totalorder %s13, 0
    %p199 = por %p197, %p198
    %p200 = scmp.ne.s32.totalorder %s189, %s192
    %p201 = scmp.eq.s32.totalorder %s18, 3
    %p202 = por %p200, %p201
    %p203 = scmp.ne.s32.totalorder %s192, %s193
    %p204 = scmp.eq.s32.totalorder %s18, 0
    %p205 = por %p203, %p204
    %p206 = scmp.ne.s32.totalorder %s192, %s193
    %p207 = scmp.eq.s32.totalorder %s19, 3
    %p208 = por %p206, %p207
    %p210 = scmp.ne.s32.totalorder %s193, %s209
    %p211 = scmp.eq.s32.totalorder %s19, 0
    %p212 = por %p210, %p211
    %p213 = scmp.le.s32.totalorder 1, %s13
    %p214 = scmp.lt.s32.totalorder %s13, 5
    %p215 = pnand %p213, %p214
    %p216 = pneg %p215
    // Predicated region
    $region9: #{tpu_custom_call.1} parent=5 // pred_check
      _
    $region10: #{tpu_custom_call.1} parent=5 // pred_check_branch
      %218 = sbr.rel (%p215) target = $region12
    $region11: #{tpu_custom_call.1} parent=5 // pred_region
      %s219 = ssub.s32 %s13, 1
      // Predicated region
      $region13: #{tpu_custom_call.1} parent=11 // pred_check
        %p220 = pneg %p72
      $region14: #{tpu_custom_call.1} parent=11 // pred_check_branch
        %222 = sbr.rel (%p220) target = $region16
      $region15: #{tpu_custom_call.1} parent=11 // pred_region
        _
      $region16: #{tpu_custom_call.1} parent=11 // pred_fallthru
        _
      // Predicated region
      $region17: #{tpu_custom_call.1} parent=11 // pred_check
        %p223 = pneg %p93
      $region18: #{tpu_custom_call.1} parent=11 // pred_check_branch
        %225 = sbr.rel (%p223) target = $region20
      $region19: #{tpu_custom_call.1} parent=11 // pred_region
        _
      $region20: #{tpu_custom_call.1} parent=11 // pred_fallthru
        _
      // Predicated region
      $region21: #{tpu_custom_call.1} parent=11 // pred_check
        %p226 = pneg %p114
      $region22: #{tpu_custom_call.1} parent=11 // pred_check_branch
        %228 = sbr.rel (%p226) target = $region24
      $region23: #{tpu_custom_call.1} parent=11 // pred_region
        _
      $region24: #{tpu_custom_call.1} parent=11 // pred_fallthru
        _
      // Predicated region
      $region25: #{tpu_custom_call.1} parent=11 // pred_check
        %p229 = pneg %p135
      $region26: #{tpu_custom_call.1} parent=11 // pred_check_branch
        %231 = sbr.rel (%p229) target = $region28
      $region27: #{tpu_custom_call.1} parent=11 // pred_region
        _
      $region28: #{tpu_custom_call.1} parent=11 // pred_fallthru
        _
      // Predicated region
      $region29: #{tpu_custom_call.1} parent=11 // pred_check
        %p232 = pneg %p156
      $region30: #{tpu_custom_call.1} parent=11 // pred_check_branch
        %234 = sbr.rel (%p232) target = $region32
      $region31: #{tpu_custom_call.1} parent=11 // pred_region
        _
      $region32: #{tpu_custom_call.1} parent=11 // pred_fallthru
        _
      // Predicated region
      $region33: #{tpu_custom_call.1} parent=11 // pred_check
        %p235 = pneg %p177
      $region34: #{tpu_custom_call.1} parent=11 // pred_check_branch
        %237 = sbr.rel (%p235) target = $region36
      $region35: #{tpu_custom_call.1} parent=11 // pred_region
        _
      $region36: #{tpu_custom_call.1} parent=11 // pred_fallthru
        _
    $region12: #{tpu_custom_call.1} parent=5 // pred_fallthru
      _
    %p238 = scmp.lt.s32.totalorder %s13, 4
    // Predicated region
    $region37: #{tpu_custom_call.1} parent=5 // pred_check
      %p239 = pneg %p238
    $region38: #{tpu_custom_call.1} parent=5 // pred_check_branch
      %241 = sbr.rel (%p239) target = $region40
    $region39: #{tpu_custom_call.1} parent=5 // pred_region
      // Predicated region
      $region41: #{tpu_custom_call.1} parent=39 // pred_check
        %p242 = pneg %p45
      $region42: #{tpu_custom_call.1} parent=39 // pred_check_branch
        %244 = sbr.rel (%p242) target = $region44
      $region43: #{tpu_custom_call.1} parent=39 // pred_region
        %p245 = scmp.lt.s32.totalorder %s20, 1
        %s246 = scalar_select %p245, %s20, 1
        %s247 = smul.addr %s246, 32
        %s248 = smul.addr %s247, 4
        %s249 = scalar_lea.vmem %s0, %s248
      $region44: #{tpu_custom_call.1} parent=39 // pred_fallthru
        _
    $region40: #{tpu_custom_call.1} parent=5 // pred_fallthru
      _
    %p250 = scmp.le.s32.totalorder 1, %s13
    %p251 = scmp.lt.s32.totalorder %s13, 5
    %p252 = pnand %p250, %p251
    %p253 = pneg %p252
    // Predicated region
    $region45: #{tpu_custom_call.1} parent=5 // pred_check
      _
    $region46: #{tpu_custom_call.1} parent=5 // pred_check_branch
      %255 = sbr.rel (%p252) target = $region48
    $region47: #{tpu_custom_call.1} parent=5 // pred_region
      %s256 = ssub.s32 %s13, 1
      %p257 = scmp.lt.s32.totalorder %s22, 1
      %s258 = scalar_select %p257, %s22, 1
      %s259 = smul.addr %s258, 32
      %s260 = smul.addr %s259, 4
      %s261 = scalar_lea.vmem %s0, %s260
      %p262 = pneg %p51
      %p263 = pneg %p48
      %p264 = pneg %p72
      %p265 = pneg %p69
      %p266 = pneg %p93
      %p267 = pneg %p90
      %p268 = pneg %p114
      %p269 = pneg %p111
      %p270 = pneg %p135
      %p271 = pneg %p132
      %p272 = pneg %p156
      %p273 = pneg %p153
      %p274 = pneg %p177
      %p275 = pneg %p174
      %p276 = pneg %p205
      %p277 = pneg %p202
      %s278 = smul.u32 8, %s23
      %p279 = scmp.lt.s32.totalorder %s22, 1
      %s280 = scalar_select %p279, %s22, 1
      %p281 = scmp.lt.s32.totalorder %s278, 15
      %s282 = scalar_select %p281, %s278, 15
      %s283 = smul.addr %s282, 2
      %s284 = smul.addr %s280, 32
      %s285 = sadd.s32 %s283, %s284
      %s286 = smul.addr %s285, 8
      %s287 = scalar_lea.vmem %s7, %s286
      %p288 = scmp.lt.s32.totalorder %s22, 1
      %s289 = scalar_select %p288, %s22, 1
      %s290 = smul.addr %s289, 32
      %s291 = smul.addr %s290, 4
      %s292 = scalar_lea.vmem %s0, %s291
      %s293 = smul.u32 8, %s23
      %p294 = scmp.lt.s32.totalorder %s22, 1
      %s295 = scalar_select %p294, %s22, 1
      %p296 = scmp.lt.s32.totalorder %s293, 15
      %s297 = scalar_select %p296, %s293, 15
      %s298 = smul.addr %s297, 2
      %s299 = smul.addr %s295, 32
      %s300 = sadd.s32 %s298, %s299
      %s301 = smul.addr %s300, 8
      %s302 = scalar_lea.vmem %s7, %s301
      %s303 = smul.u32 8, %s23
      %s305 = smul.u32 %s23, 8
      %s306 = ssub.s32 %s305, 2
      %p307 = scmp.gt.s32.totalorder %s306, 0
      %s308 = scalar_select %p307, %s306, 0
      %s309 = smul.u32 %s308, 2
      %s310 = smul.addr %s309, 4
      %s311 = scalar_lea.vmem %s292, %s310
      %v312 = vld [vmem:[%s311] sm:$0xf]
      %v313 = vld [vmem:[%s311 + $0x4] sm:$0xf]
      %v314 = vld [vmem:[%s311 + $0x8] sm:$0xf]
      %v315 = vld [vmem:[%s311 + $0xc] sm:$0xf]
      %s316 = smul.u32 %s305, 2
      %s317 = smul.addr %s316, 4
      %s318 = scalar_lea.vmem %s292, %s317
      %v319 = vld [vmem:[%s318] sm:$0xf]
      %v320 = vld [vmem:[%s318 + $0x4] sm:$0xf]
      %v321 = vld [vmem:[%s318 + $0x8] sm:$0xf]
      %v322 = vld [vmem:[%s318 + $0xc] sm:$0xf]
      %v323 = vld [vmem:[%s318 + $0x10] sm:$0xf]
      %v324 = vld [vmem:[%s318 + $0x14] sm:$0xf]
      %v325 = vld [vmem:[%s318 + $0x18] sm:$0xf]
      %v326 = vld [vmem:[%s318 + $0x1c] sm:$0xf]
      %v327 = vld [vmem:[%s318 + $0x20] sm:$0xf]
      %v328 = vld [vmem:[%s318 + $0x24] sm:$0xf]
      %v329 = vld [vmem:[%s318 + $0x28] sm:$0xf]
      %v330 = vld [vmem:[%s318 + $0x2c] sm:$0xf]
      %v331 = vld [vmem:[%s318 + $0x30] sm:$0xf]
      %v332 = vld [vmem:[%s318 + $0x34] sm:$0xf]
      %v333 = vld [vmem:[%s318 + $0x38] sm:$0xf]
      %v334 = vld [vmem:[%s318 + $0x3c] sm:$0xf]
      %s335 = sadd.s32 %s305, 8
      %p336 = scmp.lt.s32.totalorder %s335, 14
      %s337 = scalar_select %p336, %s335, 14
      %s338 = smul.u32 %s337, 2
      %s339 = smul.addr %s338, 4
      %s340 = scalar_lea.vmem %s292, %s339
      %v341 = vld [vmem:[%s340] sm:$0xf]
      %v342 = vld [vmem:[%s340 + $0x4] sm:$0xf]
      %v343 = vld [vmem:[%s340 + $0x8] sm:$0xf]
      %v344 = vld [vmem:[%s340 + $0xc] sm:$0xf]
      %p345 = scmp.gt.s32.totalorder %s23, 0
      %s346 = scalar_select %p345, 1, 0
      %v347 = vstv %s346
      %vm348 = vcmp.eq.s32.totalorder %v347, 1
      %v349 = vsel %vm348, %v312, 0
      %v350 = vsel %vm348, %v313, 0
      %v351 = vsel %vm348, %v314, 0
      %v352 = vsel %vm348, %v315, 0
      %p353 = scmp.lt.s32.totalorder %s23, 1
      %s354 = scalar_select %p353, 1, 0
      %v355 = vstv %s354
      %vm356 = vcmp.eq.s32.totalorder %v355, 1
      %v357 = vsel %vm356, %v341, 0
      %v358 = vsel %vm356, %v342, 0
      %v359 = vsel %vm356, %v343, 0
      %v360 = vsel %vm356, %v344, 0
      %v385 = vunpack.c.l.b16 %v349
      %v386 = vunpack.c.l.b16 %v350
      %v387 = vunpack.c.l.b16 %v351
      %v388 = vunpack.c.l.b16 %v352
      %v389 = vunpack.c.l.b16 %v319
      %v390 = vunpack.c.l.b16 %v320
      %v391 = vunpack.c.l.b16 %v321
      %v392 = vunpack.c.l.b16 %v322
      %v393 = vunpack.c.l.b16 %v323
      %v394 = vunpack.c.l.b16 %v324
      %v395 = vunpack.c.l.b16 %v325
      %v396 = vunpack.c.l.b16 %v326
      %v397 = vunpack.c.l.b16 %v327
      %v398 = vunpack.c.l.b16 %v328
      %v399 = vunpack.c.l.b16 %v329
      %v400 = vunpack.c.l.b16 %v330
      %v401 = vunpack.c.l.b16 %v331
      %v402 = vunpack.c.l.b16 %v332
      %v403 = vunpack.c.l.b16 %v333
      %v404 = vunpack.c.l.b16 %v334
      %v405 = vunpack.c.l.b16 %v357
      %v406 = vunpack.c.l.b16 %v358
      %v407 = vunpack.c.l.b16 %v359
      %v408 = vunpack.c.l.b16 %v360
      %v409 = vpack.c.b16 %v386, %v385
      %v410 = vpack.c.b16 %v388, %v387
      %v411 = vpack.c.b16 %v390, %v389
      %v412 = vpack.c.b16 %v392, %v391
      %v413 = vpack.c.b16 %v394, %v393
      %v414 = vpack.c.b16 %v396, %v395
      %v415 = vpack.c.b16 %v398, %v397
      %v416 = vpack.c.b16 %v400, %v399
      %v417 = vpack.c.b16 %v402, %v401
      %v418 = vpack.c.b16 %v404, %v403
      %v419 = vpack.c.b16 %v406, %v405
      %v420 = vpack.c.b16 %v408, %v407
      %v422 = vshrl.u32 %v409, 16
      %v424 = vrot.slane %v422, 7
      %v425 = vshll.u32 %v409, 16
      %v427 = vor.u32 %v424, %v425
      %v429 = vshrl.u32 %v410, 16
      %v431 = vrot.slane %v429, 7
      %v432 = vshll.u32 %v410, 16
      %v434 = vor.u32 %v431, %v432
      %v436 = vshrl.u32 %v411, 16
      %v438 = vrot.slane %v436, 7
      %v439 = vshll.u32 %v411, 16
      %v441 = vor.u32 %v438, %v439
      %v443 = vshrl.u32 %v412, 16
      %v445 = vrot.slane %v443, 7
      %v446 = vshll.u32 %v412, 16
      %v448 = vor.u32 %v445, %v446
      %v450 = vshrl.u32 %v413, 16
      %v452 = vrot.slane %v450, 7
      %v453 = vshll.u32 %v413, 16
      %v455 = vor.u32 %v452, %v453
      %v457 = vshrl.u32 %v414, 16
      %v459 = vrot.slane %v457, 7
      %v460 = vshll.u32 %v414, 16
      %v462 = vor.u32 %v459, %v460
      %v464 = vshrl.u32 %v415, 16
      %v466 = vrot.slane %v464, 7
      %v467 = vshll.u32 %v415, 16
      %v469 = vor.u32 %v466, %v467
      %v471 = vshrl.u32 %v416, 16
      %v473 = vrot.slane %v471, 7
      %v474 = vshll.u32 %v416, 16
      %v476 = vor.u32 %v473, %v474
      %v478 = vshrl.u32 %v417, 16
      %v480 = vrot.slane %v478, 7
      %v481 = vshll.u32 %v417, 16
      %v483 = vor.u32 %v480, %v481
      %v485 = vshrl.u32 %v418, 16
      %v487 = vrot.slane %v485, 7
      %v488 = vshll.u32 %v418, 16
      %v490 = vor.u32 %v487, %v488
      %v492 = vshrl.u32 %v419, 16
      %v494 = vrot.slane %v492, 7
      %v495 = vshll.u32 %v419, 16
      %v497 = vor.u32 %v494, %v495
      %v499 = vshrl.u32 %v420, 16
      %v501 = vrot.slane %v499, 7
      %v502 = vshll.u32 %v420, 16
      %v504 = vor.u32 %v501, %v502
      %vm517 = vcmask 1040384
      %vm518 = vsmask.f32 256
      %vm519 = vmand %vm517, %vm518
      %v520 = vsel %vm519, 0, %v427
      %v521 = vsel %vm519, 0, %v434
      %v522 = vsel %vm519, 0, %v441
      %v523 = vsel %vm519, 0, %v448
      %v524 = vsel %vm519, 0, %v455
      %v525 = vsel %vm519, 0, %v462
      %v526 = vsel %vm519, 0, %v469
      %v527 = vsel %vm519, 0, %v476
      %v528 = vsel %vm519, 0, %v483
      %v529 = vsel %vm519, 0, %v490
      %v530 = vsel %vm519, 0, %v497
      %v531 = vsel %vm519, 0, %v504
      %v532 = vrot.slane %v425, 1
      %v533 = vor.u32 %v422, %v532
      %v534 = vrot.slane %v432, 1
      %v535 = vor.u32 %v429, %v534
      %v536 = vrot.slane %v439, 1
      %v537 = vor.u32 %v436, %v536
      %v538 = vrot.slane %v446, 1
      %v539 = vor.u32 %v443, %v538
      %v540 = vrot.slane %v453, 1
      %v541 = vor.u32 %v450, %v540
      %v542 = vrot.slane %v460, 1
      %v543 = vor.u32 %v457, %v542
      %v544 = vrot.slane %v467, 1
      %v545 = vor.u32 %v464, %v544
      %v546 = vrot.slane %v474, 1
      %v547 = vor.u32 %v471, %v546
      %v548 = vrot.slane %v481, 1
      %v549 = vor.u32 %v478, %v548
      %v550 = vrot.slane %v488, 1
      %v551 = vor.u32 %v485, %v550
      %v552 = vrot.slane %v495, 1
      %v553 = vor.u32 %v492, %v552
      %v554 = vrot.slane %v502, 1
      %v555 = vor.u32 %v499, %v554
      %vm568 = vcmask 1047552
      %vm569 = vsmask.f32 7424
      %vm570 = vmand %vm568, %vm569
      %v571 = vsel %vm570, %v533, 0
      %v572 = vsel %vm570, %v535, 0
      %v573 = vsel %vm570, %v537, 0
      %v574 = vsel %vm570, %v539, 0
      %v575 = vsel %vm570, %v541, 0
      %v576 = vsel %vm570, %v543, 0
      %v577 = vsel %vm570, %v545, 0
      %v578 = vsel %vm570, %v547, 0
      %v579 = vsel %vm570, %v549, 0
      %v580 = vsel %vm570, %v551, 0
      %v581 = vsel %vm570, %v553, 0
      %v582 = vsel %vm570, %v555, 0
      %583 = vrot.lane.b32.xlu0 %v409, 4
      %v584 = vpop.permute.xlu0 %583
      %585 = vrot.lane.b32.xlu0 %v410, 4
      %v586 = vpop.permute.xlu0 %585
      %587 = vrot.lane.b32.xlu0 %v411, 4
      %v588 = vpop.permute.xlu0 %587
      %589 = vrot.lane.b32.xlu0 %v412, 4
      %v590 = vpop.permute.xlu0 %589
      %591 = vrot.lane.b32.xlu0 %v413, 4
      %v592 = vpop.permute.xlu0 %591
      %593 = vrot.lane.b32.xlu0 %v414, 4
      %v594 = vpop.permute.xlu0 %593
      %595 = vrot.lane.b32.xlu0 %v415, 4
      %v596 = vpop.permute.xlu0 %595
      %597 = vrot.lane.b32.xlu0 %v416, 4
      %v598 = vpop.permute.xlu0 %597
      %599 = vrot.lane.b32.xlu0 %v417, 4
      %v600 = vpop.permute.xlu0 %599
      %601 = vrot.lane.b32.xlu0 %v418, 4
      %v602 = vpop.permute.xlu0 %601
      %603 = vrot.lane.b32.xlu0 %v419, 4
      %v604 = vpop.permute.xlu0 %603
      %605 = vrot.lane.b32.xlu0 %v420, 4
      %v606 = vpop.permute.xlu0 %605
      %619 = vrot.lane.b32.xlu0 %v571, 8
      %v620 = vpop.permute.xlu0 %619
      %621 = vrot.lane.b32.xlu0 %v572, 8
      %v622 = vpop.permute.xlu0 %621
      %623 = vrot.lane.b32.xlu0 %v573, 8
      %v624 = vpop.permute.xlu0 %623
      %625 = vrot.lane.b32.xlu0 %v574, 8
      %v626 = vpop.permute.xlu0 %625
      %627 = vrot.lane.b32.xlu0 %v575, 8
      %v628 = vpop.permute.xlu0 %627
      %629 = vrot.lane.b32.xlu0 %v576, 8
      %v630 = vpop.permute.xlu0 %629
      %631 = vrot.lane.b32.xlu0 %v577, 8
      %v632 = vpop.permute.xlu0 %631
      %633 = vrot.lane.b32.xlu0 %v578, 8
      %v634 = vpop.permute.xlu0 %633
      %635 = vrot.lane.b32.xlu0 %v579, 8
      %v636 = vpop.permute.xlu0 %635
      %637 = vrot.lane.b32.xlu0 %v580, 8
      %v638 = vpop.permute.xlu0 %637
      %639 = vrot.lane.b32.xlu0 %v581, 8
      %v640 = vpop.permute.xlu0 %639
      %641 = vrot.lane.b32.xlu0 %v582, 8
      %v642 = vpop.permute.xlu0 %641
      %vm643 = vcmask 31744
      %v646 = vsel %vm643, %v520, %v584
      %v649 = vsel %vm643, %v521, %v586
      %v652 = vsel %vm643, %v522, %v588
      %v655 = vsel %vm643, %v523, %v590
      %v658 = vsel %vm643, %v524, %v592
      %v661 = vsel %vm643, %v525, %v594
      %v664 = vsel %vm643, %v526, %v596
      %v667 = vsel %vm643, %v527, %v598
      %v670 = vsel %vm643, %v528, %v600
      %v673 = vsel %vm643, %v529, %v602
      %v676 = vsel %vm643, %v530, %v604
      %v679 = vsel %vm643, %v531, %v606
      %vm680 = vcmask 64512
      %v682 = vsel %vm680, %v646, %v620
      %v684 = vsel %vm680, %v649, %v622
      %v686 = vsel %vm680, %v652, %v624
      %v688 = vsel %vm680, %v655, %v626
      %v690 = vsel %vm680, %v658, %v628
      %v692 = vsel %vm680, %v661, %v630
      %v694 = vsel %vm680, %v664, %v632
      %v696 = vsel %vm680, %v667, %v634
      %v698 = vsel %vm680, %v670, %v636
      %v700 = vsel %vm680, %v673, %v638
      %v702 = vsel %vm680, %v676, %v640
      %v704 = vsel %vm680, %v679, %v642
      %v705 = vld [vmem:[%s1] sm:$0xf]
      %v706 = vld [vmem:[%s1 + $0x4] sm:$0x3]
      %s707 = scalar_lea.vmem %s1, 8
      %v708 = vld [vmem:[%s707] sm:$0xf]
      %v709 = vld [vmem:[%s707 + $0x4] sm:$0x3]
      %v712 = vunpack.c.l.b16 %v708
      %v713 = vunpack.c.l.b16 %v709
      %v714 = vpack.c.b16 %v713, %v712
      %vm715 = vcmask 97280
      %v716 = vsel %vm715, %v684, 0
      %v718 = vsel %vm715, %v686, 0
      %v720 = vsel %vm715, %v688, 0
      %v722 = vsel %vm715, %v690, 0
      %v724 = vsel %vm715, %v692, 0
      %v726 = vsel %vm715, %v694, 0
      %v728 = vsel %vm715, %v696, 0
      %v730 = vsel %vm715, %v698, 0
      %v732 = vsel %vm715, %v700, 0
      %v734 = vsel %vm715, %v702, 0
      %vm736 = vcmask 1045504
      %v738 = vsel %vm736, %v714, 0
      %740 = vmatpush.bf16.msra.mxu0 0
      %741 = vmatpush.bf16.msra.mxu0 0
      %742 = vmatpush.bf16.msra.mxu0 0
      %743 = vmatpush.bf16.msra.mxu0 0
      %744 = vmatpush.bf16.msra.mxu0 0
      %745 = vmatpush.bf16.msra.mxu0 0
      %746 = vmatpush.bf16.msra.mxu0 0
      %747 = vmatpush.bf16.msra.mxu0 %v738
      %748 = vmatmul.bf16.gmra.mxu0 %v716
      %v749 = vpop.f32.mrf.mxu0
      %v750 = vadd.f32 0.0, %v749
      %v751 = vpop.f32.mrf.mxu0
      %v752 = vadd.f32 0.0, %v751
      %753 = vmatmul.bf16.gmra.mxu0 %v718
      %v754 = vpop.f32.mrf.mxu0
      %v755 = vadd.f32 0.0, %v754
      %v756 = vpop.f32.mrf.mxu0
      %v757 = vadd.f32 0.0, %v756
      %758 = vmatmul.bf16.gmra.mxu0 %v720
      %v759 = vpop.f32.mrf.mxu0
      %v760 = vadd.f32 0.0, %v759
      %v761 = vpop.f32.mrf.mxu0
      %v762 = vadd.f32 0.0, %v761
      %763 = vmatmul.bf16.gmra.mxu0 %v722
      %v764 = vpop.f32.mrf.mxu0
      %v765 = vadd.f32 0.0, %v764
      %v766 = vpop.f32.mrf.mxu0
      %v767 = vadd.f32 0.0, %v766
      %768 = vmatmul.bf16.gmra.mxu0 %v724
      %v769 = vpop.f32.mrf.mxu0
      %v770 = vadd.f32 0.0, %v769
      %v771 = vpop.f32.mrf.mxu0
      %v772 = vadd.f32 0.0, %v771
      %773 = vmatmul.bf16.gmra.mxu0 %v726
      %v774 = vpop.f32.mrf.mxu0
      %v775 = vadd.f32 0.0, %v774
      %v776 = vpop.f32.mrf.mxu0
      %v777 = vadd.f32 0.0, %v776
      %778 = vmatmul.bf16.gmra.mxu0 %v728
      %v779 = vpop.f32.mrf.mxu0
      %v780 = vadd.f32 0.0, %v779
      %v781 = vpop.f32.mrf.mxu0
      %v782 = vadd.f32 0.0, %v781
      %783 = vmatmul.bf16.gmra.mxu0 %v730
      %v784 = vpop.f32.mrf.mxu0
      %v785 = vadd.f32 0.0, %v784
      %v786 = vpop.f32.mrf.mxu0
      %v787 = vadd.f32 0.0, %v786
      %788 = vmatmul.bf16.gmra.mxu0 %v732
      %v789 = vpop.f32.mrf.mxu0
      %v790 = vadd.f32 0.0, %v789
      %v791 = vpop.f32.mrf.mxu0
      %v792 = vadd.f32 0.0, %v791
      %793 = vmatmul.bf16.gmra.mxu0 %v734
      %v794 = vpop.f32.mrf.mxu0
      %v795 = vadd.f32 0.0, %v794
      %v796 = vpop.f32.mrf.mxu0
      %v797 = vadd.f32 0.0, %v796
      %798 = vdwg.mxu0
      %v801 = vunpack.c.l.b16 %v705
      %v802 = vunpack.c.l.b16 %v706
      %v803 = vpack.c.b16 %v802, %v801
      %v804 = vsel %vm715, %v682, 0
      %v807 = vsel %vm736, %v803, 0
      %809 = vmatpush.bf16.msra.mxu0 0
      %810 = vmatpush.bf16.msra.mxu0 0
      %811 = vmatpush.bf16.msra.mxu0 0
      %812 = vmatpush.bf16.msra.mxu0 0
      %813 = vmatpush.bf16.msra.mxu0 0
      %814 = vmatpush.bf16.msra.mxu0 0
      %815 = vmatpush.bf16.msra.mxu0 0
      %816 = vmatpush.bf16.msra.mxu0 %v807
      %817 = vmatmul.bf16.gmra.mxu0 %v804
      %v818 = vpop.f32.mrf.mxu0
      %v819 = vadd.f32 %v750, %v818
      %v820 = vpop.f32.mrf.mxu0
      %v821 = vadd.f32 %v752, %v820
      %822 = vmatmul.bf16.gmra.mxu0 %v716
      %v823 = vpop.f32.mrf.mxu0
      %v824 = vadd.f32 %v755, %v823
      %v825 = vpop.f32.mrf.mxu0
      %v826 = vadd.f32 %v757, %v825
      %827 = vmatmul.bf16.gmra.mxu0 %v718
      %v828 = vpop.f32.mrf.mxu0
      %v829 = vadd.f32 %v760, %v828
      %v830 = vpop.f32.mrf.mxu0
      %v831 = vadd.f32 %v762, %v830
      %832 = vmatmul.bf16.gmra.mxu0 %v720
      %v833 = vpop.f32.mrf.mxu0
      %v834 = vadd.f32 %v765, %v833
      %v835 = vpop.f32.mrf.mxu0
      %v836 = vadd.f32 %v767, %v835
      %837 = vmatmul.bf16.gmra.mxu0 %v722
      %v838 = vpop.f32.mrf.mxu0
      %v839 = vadd.f32 %v770, %v838
      %v840 = vpop.f32.mrf.mxu0
      %v841 = vadd.f32 %v772, %v840
      %842 = vmatmul.bf16.gmra.mxu0 %v724
      %v843 = vpop.f32.mrf.mxu0
      %v844 = vadd.f32 %v775, %v843
      %v845 = vpop.f32.mrf.mxu0
      %v846 = vadd.f32 %v777, %v845
      %847 = vmatmul.bf16.gmra.mxu0 %v726
      %v848 = vpop.f32.mrf.mxu0
      %v849 = vadd.f32 %v780, %v848
      %v850 = vpop.f32.mrf.mxu0
      %v851 = vadd.f32 %v782, %v850
      %852 = vmatmul.bf16.gmra.mxu0 %v728
      %v853 = vpop.f32.mrf.mxu0
      %v854 = vadd.f32 %v785, %v853
      %v855 = vpop.f32.mrf.mxu0
      %v856 = vadd.f32 %v787, %v855
      %857 = vmatmul.bf16.gmra.mxu0 %v730
      %v858 = vpop.f32.mrf.mxu0
      %v859 = vadd.f32 %v790, %v858
      %v860 = vpop.f32.mrf.mxu0
      %v861 = vadd.f32 %v792, %v860
      %862 = vmatmul.bf16.gmra.mxu0 %v732
      %v863 = vpop.f32.mrf.mxu0
      %v864 = vadd.f32 %v795, %v863
      %v865 = vpop.f32.mrf.mxu0
      %v866 = vadd.f32 %v797, %v865
      %867 = vdwg.mxu0
      %s868 = scalar_lea.vmem %s1, 16
      %v869 = vld [vmem:[%s868] sm:$0xf]
      %v870 = vld [vmem:[%s868 + $0x4] sm:$0x3]
      %v873 = vunpack.c.l.b16 %v869
      %v874 = vunpack.c.l.b16 %v870
      %v875 = vpack.c.b16 %v874, %v873
      %v876 = vsel %vm715, %v704, 0
      %v879 = vsel %vm736, %v875, 0
      %881 = vmatpush.bf16.msra.mxu0 0
      %882 = vmatpush.bf16.msra.mxu0 0
      %883 = vmatpush.bf16.msra.mxu0 0
      %884 = vmatpush.bf16.msra.mxu0 0
      %885 = vmatpush.bf16.msra.mxu0 0
      %886 = vmatpush.bf16.msra.mxu0 0
      %887 = vmatpush.bf16.msra.mxu0 0
      %888 = vmatpush.bf16.msra.mxu0 %v879
      %889 = vmatmul.bf16.gmra.mxu0 %v718
      %v890 = vpop.f32.mrf.mxu0
      %v891 = vadd.f32 0.0, %v890
      %v892 = vpop.f32.mrf.mxu0
      %v893 = vadd.f32 0.0, %v892
      %894 = vmatmul.bf16.gmra.mxu0 %v720
      %v895 = vpop.f32.mrf.mxu0
      %v896 = vadd.f32 0.0, %v895
      %v897 = vpop.f32.mrf.mxu0
      %v898 = vadd.f32 0.0, %v897
      %899 = vmatmul.bf16.gmra.mxu0 %v722
      %v900 = vpop.f32.mrf.mxu0
      %v901 = vadd.f32 0.0, %v900
      %v902 = vpop.f32.mrf.mxu0
      %v903 = vadd.f32 0.0, %v902
      %904 = vmatmul.bf16.gmra.mxu0 %v724
      %v905 = vpop.f32.mrf.mxu0
      %v906 = vadd.f32 0.0, %v905
      %v907 = vpop.f32.mrf.mxu0
      %v908 = vadd.f32 0.0, %v907
      %909 = vmatmul.bf16.gmra.mxu0 %v726
      %v910 = vpop.f32.mrf.mxu0
      %v911 = vadd.f32 0.0, %v910
      %v912 = vpop.f32.mrf.mxu0
      %v913 = vadd.f32 0.0, %v912
      %914 = vmatmul.bf16.gmra.mxu0 %v728
      %v915 = vpop.f32.mrf.mxu0
      %v916 = vadd.f32 0.0, %v915
      %v917 = vpop.f32.mrf.mxu0
      %v918 = vadd.f32 0.0, %v917
      %919 = vmatmul.bf16.gmra.mxu0 %v730
      %v920 = vpop.f32.mrf.mxu0
      %v921 = vadd.f32 0.0, %v920
      %v922 = vpop.f32.mrf.mxu0
      %v923 = vadd.f32 0.0, %v922
      %924 = vmatmul.bf16.gmra.mxu0 %v732
      %v925 = vpop.f32.mrf.mxu0
      %v926 = vadd.f32 0.0, %v925
      %v927 = vpop.f32.mrf.mxu0
      %v928 = vadd.f32 0.0, %v927
      %929 = vmatmul.bf16.gmra.mxu0 %v734
      %v930 = vpop.f32.mrf.mxu0
      %v931 = vadd.f32 0.0, %v930
      %v932 = vpop.f32.mrf.mxu0
      %v933 = vadd.f32 0.0, %v932
      %934 = vmatmul.bf16.gmra.mxu0 %v876
      %v935 = vpop.f32.mrf.mxu0
      %v936 = vadd.f32 0.0, %v935
      %v937 = vpop.f32.mrf.mxu0
      %v938 = vadd.f32 0.0, %v937
      %939 = vdwg.mxu0
      %v940 = vadd.f32 %v819, %v891
      %v941 = vadd.f32 %v821, %v893
      %v942 = vadd.f32 %v824, %v896
      %v943 = vadd.f32 %v826, %v898
      %v944 = vadd.f32 %v829, %v901
      %v945 = vadd.f32 %v831, %v903
      %v946 = vadd.f32 %v834, %v906
      %v947 = vadd.f32 %v836, %v908
      %v948 = vadd.f32 %v839, %v911
      %v949 = vadd.f32 %v841, %v913
      %v950 = vadd.f32 %v844, %v916
      %v951 = vadd.f32 %v846, %v918
      %v952 = vadd.f32 %v849, %v921
      %v953 = vadd.f32 %v851, %v923
      %v954 = vadd.f32 %v854, %v926
      %v955 = vadd.f32 %v856, %v928
      %v956 = vadd.f32 %v859, %v931
      %v957 = vadd.f32 %v861, %v933
      %v958 = vadd.f32 %v864, %v936
      %v959 = vadd.f32 %v866, %v938
      %v960 = vld [vmem:[%s2] sm:$0x1]
      %v962 = vperm.slane %v960, 0
      %v964 = vmul.f32 %v940, %v962
      %v965 = vmul.f32 %v941, %v962
      %v966 = vmul.f32 %v942, %v962
      %v967 = vmul.f32 %v943, %v962
      %v968 = vmul.f32 %v944, %v962
      %v969 = vmul.f32 %v945, %v962
      %v970 = vmul.f32 %v946, %v962
      %v971 = vmul.f32 %v947, %v962
      %v972 = vmul.f32 %v948, %v962
      %v973 = vmul.f32 %v949, %v962
      %v974 = vmul.f32 %v950, %v962
      %v975 = vmul.f32 %v951, %v962
      %v976 = vmul.f32 %v952, %v962
      %v977 = vmul.f32 %v953, %v962
      %v978 = vmul.f32 %v954, %v962
      %v979 = vmul.f32 %v955, %v962
      %v980 = vmul.f32 %v956, %v962
      %v981 = vmul.f32 %v957, %v962
      %v982 = vmul.f32 %v958, %v962
      %v983 = vmul.f32 %v959, %v962
      %v984 = vld [vmem:[%s3] sm:$0x1]
      %v986 = vperm.slane %v984, 0
      %v988 = vadd.f32 %v964, %v986
      %v989 = vadd.f32 %v965, %v986
      %v990 = vadd.f32 %v966, %v986
      %v991 = vadd.f32 %v967, %v986
      %v992 = vadd.f32 %v968, %v986
      %v993 = vadd.f32 %v969, %v986
      %v994 = vadd.f32 %v970, %v986
      %v995 = vadd.f32 %v971, %v986
      %v996 = vadd.f32 %v972, %v986
      %v997 = vadd.f32 %v973, %v986
      %v998 = vadd.f32 %v974, %v986
      %v999 = vadd.f32 %v975, %v986
      %v1000 = vadd.f32 %v976, %v986
      %v1001 = vadd.f32 %v977, %v986
      %v1002 = vadd.f32 %v978, %v986
      %v1003 = vadd.f32 %v979, %v986
      %v1004 = vadd.f32 %v980, %v986
      %v1005 = vadd.f32 %v981, %v986
      %v1006 = vadd.f32 %v982, %v986
      %v1007 = vadd.f32 %v983, %v986
      %v1008 = vmax.f32 %v988, 0.0
      %v1009 = vmax.f32 %v989, 0.0
      %v1010 = vmax.f32 %v990, 0.0
      %v1011 = vmax.f32 %v991, 0.0
      %v1012 = vmax.f32 %v992, 0.0
      %v1013 = vmax.f32 %v993, 0.0
      %v1014 = vmax.f32 %v994, 0.0
      %v1015 = vmax.f32 %v995, 0.0
      %v1016 = vmax.f32 %v996, 0.0
      %v1017 = vmax.f32 %v997, 0.0
      %v1018 = vmax.f32 %v998, 0.0
      %v1019 = vmax.f32 %v999, 0.0
      %v1020 = vmax.f32 %v1000, 0.0
      %v1021 = vmax.f32 %v1001, 0.0
      %v1022 = vmax.f32 %v1002, 0.0
      %v1023 = vmax.f32 %v1003, 0.0
      %v1024 = vmax.f32 %v1004, 0.0
      %v1025 = vmax.f32 %v1005, 0.0
      %v1026 = vmax.f32 %v1006, 0.0
      %v1027 = vmax.f32 %v1007, 0.0
      %v1028 = vsel %vm348, %v1008, 0.0
      %v1029 = vsel %vm348, %v1009, 0.0
      %v1030 = vsel %vm356, %v1026, 0.0
      %v1031 = vsel %vm356, %v1027, 0.0
      %v1032 = vpack.c.bf16 %v1028, %v1028
      %v1033 = vpack.c.bf16 %v1029, %v1029
      %v1034 = vpack.c.bf16 %v1010, %v1010
      %v1035 = vpack.c.bf16 %v1011, %v1011
      %v1036 = vpack.c.bf16 %v1012, %v1012
      %v1037 = vpack.c.bf16 %v1013, %v1013
      %v1038 = vpack.c.bf16 %v1014, %v1014
      %v1039 = vpack.c.bf16 %v1015, %v1015
      %v1040 = vpack.c.bf16 %v1016, %v1016
      %v1041 = vpack.c.bf16 %v1017, %v1017
      %v1042 = vpack.c.bf16 %v1018, %v1018
      %v1043 = vpack.c.bf16 %v1019, %v1019
      %v1044 = vpack.c.bf16 %v1020, %v1020
      %v1045 = vpack.c.bf16 %v1021, %v1021
      %v1046 = vpack.c.bf16 %v1022, %v1022
      %v1047 = vpack.c.bf16 %v1023, %v1023
      %v1048 = vpack.c.bf16 %v1024, %v1024
      %v1049 = vpack.c.bf16 %v1025, %v1025
      %v1050 = vpack.c.bf16 %v1030, %v1030
      %v1051 = vpack.c.bf16 %v1031, %v1031
      %v1072 = vunpack.c.l.b16 %v1032
      %v1073 = vunpack.c.l.b16 %v1033
      %v1074 = vunpack.c.l.b16 %v1034
      %v1075 = vunpack.c.l.b16 %v1035
      %v1076 = vunpack.c.l.b16 %v1036
      %v1077 = vunpack.c.l.b16 %v1037
      %v1078 = vunpack.c.l.b16 %v1038
      %v1079 = vunpack.c.l.b16 %v1039
      %v1080 = vunpack.c.l.b16 %v1040
      %v1081 = vunpack.c.l.b16 %v1041
      %v1082 = vunpack.c.l.b16 %v1042
      %v1083 = vunpack.c.l.b16 %v1043
      %v1084 = vunpack.c.l.b16 %v1044
      %v1085 = vunpack.c.l.b16 %v1045
      %v1086 = vunpack.c.l.b16 %v1046
      %v1087 = vunpack.c.l.b16 %v1047
      %v1088 = vunpack.c.l.b16 %v1048
      %v1089 = vunpack.c.l.b16 %v1049
      %v1090 = vunpack.c.l.b16 %v1050
      %v1091 = vunpack.c.l.b16 %v1051
      %v1092 = vpack.c.b16 %v1073, %v1072
      %v1093 = vpack.c.b16 %v1075, %v1074
      %v1094 = vpack.c.b16 %v1077, %v1076
      %v1095 = vpack.c.b16 %v1079, %v1078
      %v1096 = vpack.c.b16 %v1081, %v1080
      %v1097 = vpack.c.b16 %v1083, %v1082
      %v1098 = vpack.c.b16 %v1085, %v1084
      %v1099 = vpack.c.b16 %v1087, %v1086
      %v1100 = vpack.c.b16 %v1089, %v1088
      %v1101 = vpack.c.b16 %v1091, %v1090
      %v1103 = vshrl.u32 %v1092, 16
      %v1105 = vrot.slane %v1103, 7
      %v1106 = vshll.u32 %v1092, 16
      %v1108 = vor.u32 %v1105, %v1106
      %v1110 = vshrl.u32 %v1093, 16
      %v1112 = vrot.slane %v1110, 7
      %v1113 = vshll.u32 %v1093, 16
      %v1115 = vor.u32 %v1112, %v1113
      %v1117 = vshrl.u32 %v1094, 16
      %v1119 = vrot.slane %v1117, 7
      %v1120 = vshll.u32 %v1094, 16
      %v1122 = vor.u32 %v1119, %v1120
      %v1124 = vshrl.u32 %v1095, 16
      %v1126 = vrot.slane %v1124, 7
      %v1127 = vshll.u32 %v1095, 16
      %v1129 = vor.u32 %v1126, %v1127
      %v1131 = vshrl.u32 %v1096, 16
      %v1133 = vrot.slane %v1131, 7
      %v1134 = vshll.u32 %v1096, 16
      %v1136 = vor.u32 %v1133, %v1134
      %v1138 = vshrl.u32 %v1097, 16
      %v1140 = vrot.slane %v1138, 7
      %v1141 = vshll.u32 %v1097, 16
      %v1143 = vor.u32 %v1140, %v1141
      %v1145 = vshrl.u32 %v1098, 16
      %v1147 = vrot.slane %v1145, 7
      %v1148 = vshll.u32 %v1098, 16
      %v1150 = vor.u32 %v1147, %v1148
      %v1152 = vshrl.u32 %v1099, 16
      %v1154 = vrot.slane %v1152, 7
      %v1155 = vshll.u32 %v1099, 16
      %v1157 = vor.u32 %v1154, %v1155
      %v1159 = vshrl.u32 %v1100, 16
      %v1161 = vrot.slane %v1159, 7
      %v1162 = vshll.u32 %v1100, 16
      %v1164 = vor.u32 %v1161, %v1162
      %v1166 = vshrl.u32 %v1101, 16
      %v1168 = vrot.slane %v1166, 7
      %v1169 = vshll.u32 %v1101, 16
      %v1171 = vor.u32 %v1168, %v1169
      %v1182 = vsel %vm519, 0, %v1108
      %v1183 = vsel %vm519, 0, %v1115
      %v1184 = vsel %vm519, 0, %v1122
      %v1185 = vsel %vm519, 0, %v1129
      %v1186 = vsel %vm519, 0, %v1136
      %v1187 = vsel %vm519, 0, %v1143
      %v1188 = vsel %vm519, 0, %v1150
      %v1189 = vsel %vm519, 0, %v1157
      %v1190 = vsel %vm519, 0, %v1164
      %v1191 = vsel %vm519, 0, %v1171
      %v1192 = vrot.slane %v1106, 1
      %v1193 = vor.u32 %v1103, %v1192
      %v1194 = vrot.slane %v1113, 1
      %v1195 = vor.u32 %v1110, %v1194
      %v1196 = vrot.slane %v1120, 1
      %v1197 = vor.u32 %v1117, %v1196
      %v1198 = vrot.slane %v1127, 1
      %v1199 = vor.u32 %v1124, %v1198
      %v1200 = vrot.slane %v1134, 1
      %v1201 = vor.u32 %v1131, %v1200
      %v1202 = vrot.slane %v1141, 1
      %v1203 = vor.u32 %v1138, %v1202
      %v1204 = vrot.slane %v1148, 1
      %v1205 = vor.u32 %v1145, %v1204
      %v1206 = vrot.slane %v1155, 1
      %v1207 = vor.u32 %v1152, %v1206
      %v1208 = vrot.slane %v1162, 1
      %v1209 = vor.u32 %v1159, %v1208
      %v1210 = vrot.slane %v1169, 1
      %v1211 = vor.u32 %v1166, %v1210
      %v1222 = vsel %vm570, %v1193, 0
      %v1223 = vsel %vm570, %v1195, 0
      %v1224 = vsel %vm570, %v1197, 0
      %v1225 = vsel %vm570, %v1199, 0
      %v1226 = vsel %vm570, %v1201, 0
      %v1227 = vsel %vm570, %v1203, 0
      %v1228 = vsel %vm570, %v1205, 0
      %v1229 = vsel %vm570, %v1207, 0
      %v1230 = vsel %vm570, %v1209, 0
      %v1231 = vsel %vm570, %v1211, 0
      %1232 = vrot.lane.b32.xlu0 %v1092, 8
      %v1233 = vpop.permute.xlu0 %1232
      %1234 = vrot.lane.b32.xlu0 %v1093, 8
      %v1235 = vpop.permute.xlu0 %1234
      %1236 = vrot.lane.b32.xlu0 %v1094, 8
      %v1237 = vpop.permute.xlu0 %1236
      %1238 = vrot.lane.b32.xlu0 %v1095, 8
      %v1239 = vpop.permute.xlu0 %1238
      %1240 = vrot.lane.b32.xlu0 %v1096, 8
      %v1241 = vpop.permute.xlu0 %1240
      %1242 = vrot.lane.b32.xlu0 %v1097, 8
      %v1243 = vpop.permute.xlu0 %1242
      %1244 = vrot.lane.b32.xlu0 %v1098, 8
      %v1245 = vpop.permute.xlu0 %1244
      %1246 = vrot.lane.b32.xlu0 %v1099, 8
      %v1247 = vpop.permute.xlu0 %1246
      %1248 = vrot.lane.b32.xlu0 %v1100, 8
      %v1249 = vpop.permute.xlu0 %1248
      %1250 = vrot.lane.b32.xlu0 %v1101, 8
      %v1251 = vpop.permute.xlu0 %1250
      %1262 = vrot.lane.b32.xlu0 %v1222, 16
      %v1263 = vpop.permute.xlu0 %1262
      %1264 = vrot.lane.b32.xlu0 %v1223, 16
      %v1265 = vpop.permute.xlu0 %1264
      %1266 = vrot.lane.b32.xlu0 %v1224, 16
      %v1267 = vpop.permute.xlu0 %1266
      %1268 = vrot.lane.b32.xlu0 %v1225, 16
      %v1269 = vpop.permute.xlu0 %1268
      %1270 = vrot.lane.b32.xlu0 %v1226, 16
      %v1271 = vpop.permute.xlu0 %1270
      %1272 = vrot.lane.b32.xlu0 %v1227, 16
      %v1273 = vpop.permute.xlu0 %1272
      %1274 = vrot.lane.b32.xlu0 %v1228, 16
      %v1275 = vpop.permute.xlu0 %1274
      %1276 = vrot.lane.b32.xlu0 %v1229, 16
      %v1277 = vpop.permute.xlu0 %1276
      %1278 = vrot.lane.b32.xlu0 %v1230, 16
      %v1279 = vpop.permute.xlu0 %1278
      %1280 = vrot.lane.b32.xlu0 %v1231, 16
      %v1281 = vpop.permute.xlu0 %1280
      %v1284 = vsel %vm680, %v1182, %v1233
      %v1287 = vsel %vm680, %v1183, %v1235
      %v1290 = vsel %vm680, %v1184, %v1237
      %v1293 = vsel %vm680, %v1185, %v1239
      %v1296 = vsel %vm680, %v1186, %v1241
      %v1299 = vsel %vm680, %v1187, %v1243
      %v1302 = vsel %vm680, %v1188, %v1245
      %v1305 = vsel %vm680, %v1189, %v1247
      %v1308 = vsel %vm680, %v1190, %v1249
      %v1311 = vsel %vm680, %v1191, %v1251
      %vm1312 = vcmask 130048
      %v1314 = vsel %vm1312, %v1284, %v1263
      %v1316 = vsel %vm1312, %v1287, %v1265
      %v1318 = vsel %vm1312, %v1290, %v1267
      %v1320 = vsel %vm1312, %v1293, %v1269
      %v1322 = vsel %vm1312, %v1296, %v1271
      %v1324 = vsel %vm1312, %v1299, %v1273
      %v1326 = vsel %vm1312, %v1302, %v1275
      %v1328 = vsel %vm1312, %v1305, %v1277
      %v1330 = vsel %vm1312, %v1308, %v1279
      %v1332 = vsel %vm1312, %v1311, %v1281
      %v1333 = vld [vmem:[%s4] sm:$0xf]
      %v1334 = vld [vmem:[%s4 + $0x4] sm:$0xf]
      %v1335 = vld [vmem:[%s4 + $0x8] sm:$0xf]
      %s1336 = scalar_lea.vmem %s4, 12
      %v1337 = vld [vmem:[%s1336] sm:$0xf]
      %v1338 = vld [vmem:[%s1336 + $0x4] sm:$0xf]
      %v1339 = vld [vmem:[%s1336 + $0x8] sm:$0xf]
      %v1343 = vunpack.c.l.b16 %v1337
      %v1344 = vunpack.c.l.b16 %v1338
      %v1345 = vunpack.c.l.b16 %v1339
      %v1346 = vpack.c.b16 %v1344, %v1343
      %v1347 = vpack.c.b16 %v1345, %v1345
      %vm1349 = vcmask 195584
      %v1350 = vsel %vm1349, %v1316, 0
      %v1352 = vsel %vm1349, %v1318, 0
      %v1354 = vsel %vm1349, %v1320, 0
      %v1356 = vsel %vm1349, %v1322, 0
      %v1358 = vsel %vm1349, %v1324, 0
      %v1360 = vsel %vm1349, %v1326, 0
      %v1362 = vsel %vm1349, %v1328, 0
      %v1364 = vsel %vm1349, %v1330, 0
      %vm1366 = vcmask 1043456
      %v1368 = vsel %vm1366, %v1347, 0
      %1370 = vmatpush.bf16.msra.mxu0 0
      %1371 = vmatpush.bf16.msra.mxu0 0
      %1372 = vmatpush.bf16.msra.mxu0 0
      %1373 = vmatpush.bf16.msra.mxu0 0
      %1374 = vmatpush.bf16.msra.mxu0 0
      %1375 = vmatpush.bf16.msra.mxu0 0
      %1376 = vmatpush.bf16.msra.mxu0 %v1368
      %1377 = vmatpush.bf16.msra.mxu0 %v1346
      %1378 = vmatmul.bf16.gmra.mxu0 %v1350
      %v1379 = vpop.f32.mrf.mxu0
      %v1380 = vadd.f32 0.0, %v1379
      %v1381 = vpop.f32.mrf.mxu0
      %v1382 = vadd.f32 0.0, %v1381
      %1383 = vmatmul.bf16.gmra.mxu0 %v1352
      %v1384 = vpop.f32.mrf.mxu0
      %v1385 = vadd.f32 0.0, %v1384
      %v1386 = vpop.f32.mrf.mxu0
      %v1387 = vadd.f32 0.0, %v1386
      %1388 = vmatmul.bf16.gmra.mxu0 %v1354
      %v1389 = vpop.f32.mrf.mxu0
      %v1390 = vadd.f32 0.0, %v1389
      %v1391 = vpop.f32.mrf.mxu0
      %v1392 = vadd.f32 0.0, %v1391
      %1393 = vmatmul.bf16.gmra.mxu0 %v1356
      %v1394 = vpop.f32.mrf.mxu0
      %v1395 = vadd.f32 0.0, %v1394
      %v1396 = vpop.f32.mrf.mxu0
      %v1397 = vadd.f32 0.0, %v1396
      %1398 = vmatmul.bf16.gmra.mxu0 %v1358
      %v1399 = vpop.f32.mrf.mxu0
      %v1400 = vadd.f32 0.0, %v1399
      %v1401 = vpop.f32.mrf.mxu0
      %v1402 = vadd.f32 0.0, %v1401
      %1403 = vmatmul.bf16.gmra.mxu0 %v1360
      %v1404 = vpop.f32.mrf.mxu0
      %v1405 = vadd.f32 0.0, %v1404
      %v1406 = vpop.f32.mrf.mxu0
      %v1407 = vadd.f32 0.0, %v1406
      %1408 = vmatmul.bf16.gmra.mxu0 %v1362
      %v1409 = vpop.f32.mrf.mxu0
      %v1410 = vadd.f32 0.0, %v1409
      %v1411 = vpop.f32.mrf.mxu0
      %v1412 = vadd.f32 0.0, %v1411
      %1413 = vmatmul.bf16.gmra.mxu0 %v1364
      %v1414 = vpop.f32.mrf.mxu0
      %v1415 = vadd.f32 0.0, %v1414
      %v1416 = vpop.f32.mrf.mxu0
      %v1417 = vadd.f32 0.0, %v1416
      %1418 = vdwg.mxu0
      %v1422 = vunpack.c.l.b16 %v1333
      %v1423 = vunpack.c.l.b16 %v1334
      %v1424 = vunpack.c.l.b16 %v1335
      %v1425 = vpack.c.b16 %v1423, %v1422
      %v1426 = vpack.c.b16 %v1424, %v1424
      %v1428 = vsel %vm1349, %v1314, 0
      %v1431 = vsel %vm1366, %v1426, 0
      %1433 = vmatpush.bf16.msra.mxu0 0
      %1434 = vmatpush.bf16.msra.mxu0 0
      %1435 = vmatpush.bf16.msra.mxu0 0
      %1436 = vmatpush.bf16.msra.mxu0 0
      %1437 = vmatpush.bf16.msra.mxu0 0
      %1438 = vmatpush.bf16.msra.mxu0 0
      %1439 = vmatpush.bf16.msra.mxu0 %v1431
      %1440 = vmatpush.bf16.msra.mxu0 %v1425
      %1441 = vmatmul.bf16.gmra.mxu0 %v1428
      %v1442 = vpop.f32.mrf.mxu0
      %v1443 = vadd.f32 %v1380, %v1442
      %v1444 = vpop.f32.mrf.mxu0
      %v1445 = vadd.f32 %v1382, %v1444
      %1446 = vmatmul.bf16.gmra.mxu0 %v1350
      %v1447 = vpop.f32.mrf.mxu0
      %v1448 = vadd.f32 %v1385, %v1447
      %v1449 = vpop.f32.mrf.mxu0
      %v1450 = vadd.f32 %v1387, %v1449
      %1451 = vmatmul.bf16.gmra.mxu0 %v1352
      %v1452 = vpop.f32.mrf.mxu0
      %v1453 = vadd.f32 %v1390, %v1452
      %v1454 = vpop.f32.mrf.mxu0
      %v1455 = vadd.f32 %v1392, %v1454
      %1456 = vmatmul.bf16.gmra.mxu0 %v1354
      %v1457 = vpop.f32.mrf.mxu0
      %v1458 = vadd.f32 %v1395, %v1457
      %v1459 = vpop.f32.mrf.mxu0
      %v1460 = vadd.f32 %v1397, %v1459
      %1461 = vmatmul.bf16.gmra.mxu0 %v1356
      %v1462 = vpop.f32.mrf.mxu0
      %v1463 = vadd.f32 %v1400, %v1462
      %v1464 = vpop.f32.mrf.mxu0
      %v1465 = vadd.f32 %v1402, %v1464
      %1466 = vmatmul.bf16.gmra.mxu0 %v1358
      %v1467 = vpop.f32.mrf.mxu0
      %v1468 = vadd.f32 %v1405, %v1467
      %v1469 = vpop.f32.mrf.mxu0
      %v1470 = vadd.f32 %v1407, %v1469
      %1471 = vmatmul.bf16.gmra.mxu0 %v1360
      %v1472 = vpop.f32.mrf.mxu0
      %v1473 = vadd.f32 %v1410, %v1472
      %v1474 = vpop.f32.mrf.mxu0
      %v1475 = vadd.f32 %v1412, %v1474
      %1476 = vmatmul.bf16.gmra.mxu0 %v1362
      %v1477 = vpop.f32.mrf.mxu0
      %v1478 = vadd.f32 %v1415, %v1477
      %v1479 = vpop.f32.mrf.mxu0
      %v1480 = vadd.f32 %v1417, %v1479
      %1481 = vdwg.mxu0
      %s1482 = scalar_lea.vmem %s4, 24
      %v1483 = vld [vmem:[%s1482] sm:$0xf]
      %v1484 = vld [vmem:[%s1482 + $0x4] sm:$0xf]
      %v1485 = vld [vmem:[%s1482 + $0x8] sm:$0xf]
      %v1489 = vunpack.c.l.b16 %v1483
      %v1490 = vunpack.c.l.b16 %v1484
      %v1491 = vunpack.c.l.b16 %v1485
      %v1492 = vpack.c.b16 %v1490, %v1489
      %v1493 = vpack.c.b16 %v1491, %v1491
      %v1495 = vsel %vm1349, %v1332, 0
      %v1498 = vsel %vm1366, %v1493, 0
      %1500 = vmatpush.bf16.msra.mxu0 0
      %1501 = vmatpush.bf16.msra.mxu0 0
      %1502 = vmatpush.bf16.msra.mxu0 0
      %1503 = vmatpush.bf16.msra.mxu0 0
      %1504 = vmatpush.bf16.msra.mxu0 0
      %1505 = vmatpush.bf16.msra.mxu0 0
      %1506 = vmatpush.bf16.msra.mxu0 %v1498
      %1507 = vmatpush.bf16.msra.mxu0 %v1492
      %1508 = vmatmul.bf16.gmra.mxu0 %v1352
      %v1509 = vpop.f32.mrf.mxu0
      %v1510 = vadd.f32 0.0, %v1509
      %v1511 = vpop.f32.mrf.mxu0
      %v1512 = vadd.f32 0.0, %v1511
      %1513 = vmatmul.bf16.gmra.mxu0 %v1354
      %v1514 = vpop.f32.mrf.mxu0
      %v1515 = vadd.f32 0.0, %v1514
      %v1516 = vpop.f32.mrf.mxu0
      %v1517 = vadd.f32 0.0, %v1516
      %1518 = vmatmul.bf16.gmra.mxu0 %v1356
      %v1519 = vpop.f32.mrf.mxu0
      %v1520 = vadd.f32 0.0, %v1519
      %v1521 = vpop.f32.mrf.mxu0
      %v1522 = vadd.f32 0.0, %v1521
      %1523 = vmatmul.bf16.gmra.mxu0 %v1358
      %v1524 = vpop.f32.mrf.mxu0
      %v1525 = vadd.f32 0.0, %v1524
      %v1526 = vpop.f32.mrf.mxu0
      %v1527 = vadd.f32 0.0, %v1526
      %1528 = vmatmul.bf16.gmra.mxu0 %v1360
      %v1529 = vpop.f32.mrf.mxu0
      %v1530 = vadd.f32 0.0, %v1529
      %v1531 = vpop.f32.mrf.mxu0
      %v1532 = vadd.f32 0.0, %v1531
      %1533 = vmatmul.bf16.gmra.mxu0 %v1362
      %v1534 = vpop.f32.mrf.mxu0
      %v1535 = vadd.f32 0.0, %v1534
      %v1536 = vpop.f32.mrf.mxu0
      %v1537 = vadd.f32 0.0, %v1536
      %1538 = vmatmul.bf16.gmra.mxu0 %v1364
      %v1539 = vpop.f32.mrf.mxu0
      %v1540 = vadd.f32 0.0, %v1539
      %v1541 = vpop.f32.mrf.mxu0
      %v1542 = vadd.f32 0.0, %v1541
      %1543 = vmatmul.bf16.gmra.mxu0 %v1495
      %v1544 = vpop.f32.mrf.mxu0
      %v1545 = vadd.f32 0.0, %v1544
      %v1546 = vpop.f32.mrf.mxu0
      %v1547 = vadd.f32 0.0, %v1546
      %1548 = vdwg.mxu0
      %v1549 = vadd.f32 %v1443, %v1510
      %v1550 = vadd.f32 %v1445, %v1512
      %v1551 = vadd.f32 %v1448, %v1515
      %v1552 = vadd.f32 %v1450, %v1517
      %v1553 = vadd.f32 %v1453, %v1520
      %v1554 = vadd.f32 %v1455, %v1522
      %v1555 = vadd.f32 %v1458, %v1525
      %v1556 = vadd.f32 %v1460, %v1527
      %v1557 = vadd.f32 %v1463, %v1530
      %v1558 = vadd.f32 %v1465, %v1532
      %v1559 = vadd.f32 %v1468, %v1535
      %v1560 = vadd.f32 %v1470, %v1537
      %v1561 = vadd.f32 %v1473, %v1540
      %v1562 = vadd.f32 %v1475, %v1542
      %v1563 = vadd.f32 %v1478, %v1545
      %v1564 = vadd.f32 %v1480, %v1547
      %v1565 = vld [vmem:[%s5] sm:$0x1]
      %v1567 = vperm.slane %v1565, 0
      %v1569 = vmul.f32 %v1549, %v1567
      %v1570 = vmul.f32 %v1550, %v1567
      %v1571 = vmul.f32 %v1551, %v1567
      %v1572 = vmul.f32 %v1552, %v1567
      %v1573 = vmul.f32 %v1553, %v1567
      %v1574 = vmul.f32 %v1554, %v1567
      %v1575 = vmul.f32 %v1555, %v1567
      %v1576 = vmul.f32 %v1556, %v1567
      %v1577 = vmul.f32 %v1557, %v1567
      %v1578 = vmul.f32 %v1558, %v1567
      %v1579 = vmul.f32 %v1559, %v1567
      %v1580 = vmul.f32 %v1560, %v1567
      %v1581 = vmul.f32 %v1561, %v1567
      %v1582 = vmul.f32 %v1562, %v1567
      %v1583 = vmul.f32 %v1563, %v1567
      %v1584 = vmul.f32 %v1564, %v1567
      %v1585 = vld [vmem:[%s6] sm:$0x1]
      %v1587 = vperm.slane %v1585, 0
      %v1589 = vadd.f32 %v1569, %v1587
      %v1590 = vadd.f32 %v1570, %v1587
      %v1591 = vadd.f32 %v1571, %v1587
      %v1592 = vadd.f32 %v1572, %v1587
      %v1593 = vadd.f32 %v1573, %v1587
      %v1594 = vadd.f32 %v1574, %v1587
      %v1595 = vadd.f32 %v1575, %v1587
      %v1596 = vadd.f32 %v1576, %v1587
      %v1597 = vadd.f32 %v1577, %v1587
      %v1598 = vadd.f32 %v1578, %v1587
      %v1599 = vadd.f32 %v1579, %v1587
      %v1600 = vadd.f32 %v1580, %v1587
      %v1601 = vadd.f32 %v1581, %v1587
      %v1602 = vadd.f32 %v1582, %v1587
      %v1603 = vadd.f32 %v1583, %v1587
      %v1604 = vadd.f32 %v1584, %v1587
      %v1605 = vmax.f32 %v1589, 0.0
      %v1606 = vmax.f32 %v1590, 0.0
      %v1607 = vmax.f32 %v1591, 0.0
      %v1608 = vmax.f32 %v1592, 0.0
      %v1609 = vmax.f32 %v1593, 0.0
      %v1610 = vmax.f32 %v1594, 0.0
      %v1611 = vmax.f32 %v1595, 0.0
      %v1612 = vmax.f32 %v1596, 0.0
      %v1613 = vmax.f32 %v1597, 0.0
      %v1614 = vmax.f32 %v1598, 0.0
      %v1615 = vmax.f32 %v1599, 0.0
      %v1616 = vmax.f32 %v1600, 0.0
      %v1617 = vmax.f32 %v1601, 0.0
      %v1618 = vmax.f32 %v1602, 0.0
      %v1619 = vmax.f32 %v1603, 0.0
      %v1620 = vmax.f32 %v1604, 0.0
      %1621 = vst.msk [vmem:[%s302] sm:$0xff] %vm680, %v1605
      %1622 = vst.msk [vmem:[%s302 + $0x8] sm:$0xff] %vm680, %v1606
      %1623 = vst.msk [vmem:[%s302 + $0x10] sm:$0xff] %vm680, %v1607
      %1624 = vst.msk [vmem:[%s302 + $0x18] sm:$0xff] %vm680, %v1608
      %1625 = vst.msk [vmem:[%s302 + $0x20] sm:$0xff] %vm680, %v1609
      %1626 = vst.msk [vmem:[%s302 + $0x28] sm:$0xff] %vm680, %v1610
      %1627 = vst.msk [vmem:[%s302 + $0x30] sm:$0xff] %vm680, %v1611
      %1628 = vst.msk [vmem:[%s302 + $0x38] sm:$0xff] %vm680, %v1612
      %1629 = vst.msk [vmem:[%s302 + $0x40] sm:$0xff] %vm680, %v1613
      %1630 = vst.msk [vmem:[%s302 + $0x48] sm:$0xff] %vm680, %v1614
      %1631 = vst.msk [vmem:[%s302 + $0x50] sm:$0xff] %vm680, %v1615
      %1632 = vst.msk [vmem:[%s302 + $0x58] sm:$0xff] %vm680, %v1616
      %1633 = vst.msk [vmem:[%s302 + $0x60] sm:$0xff] %vm680, %v1617
      %1634 = vst.msk [vmem:[%s302 + $0x68] sm:$0xff] %vm680, %v1618
      %1635 = vst.msk [vmem:[%s302 + $0x70] sm:$0xff] %vm680, %v1619
      %1636 = vst.msk [vmem:[%s302 + $0x78] sm:$0xff] %vm680, %v1620
      %s1637 = smul.u32 8, %s23
      %p1638 = scmp.lt.s32.totalorder %s22, 1
      %s1639 = scalar_select %p1638, %s22, 1
      %p1640 = scmp.lt.s32.totalorder %s1637, 15
      %s1641 = scalar_select %p1640, %s1637, 15
      %s1642 = smul.addr %s1641, 2
      %s1643 = smul.addr %s1639, 32
      %s1644 = sadd.s32 %s1642, %s1643
      %s1645 = smul.addr %s1644, 8
      %s1646 = scalar_lea.vmem %s7, %s1645
      // Predicated region
      $region49: #{tpu_custom_call.1} parent=47 // pred_check
        %p1647 = pneg %p202
      $region50: #{tpu_custom_call.1} parent=47 // pred_check_branch
        %1649 = sbr.rel (%p1647) target = $region52
      $region51: #{tpu_custom_call.1} parent=47 // pred_region
        %s1650 = smul.u32 8, %s23
      $region52: #{tpu_custom_call.1} parent=47 // pred_fallthru
        _
    $region48: #{tpu_custom_call.1} parent=5 // pred_fallthru
      _
    %p1651 = scmp.le.s32.totalorder 2, %s13
    // Predicated region
    $region53: #{tpu_custom_call.1} parent=5 // pred_check
      %p1652 = pneg %p1651
    $region54: #{tpu_custom_call.1} parent=5 // pred_check_branch
      %1654 = sbr.rel (%p1652) target = $region56
    $region55: #{tpu_custom_call.1} parent=5 // pred_region
      %s1655 = ssub.s32 %s13, 2
      // Predicated region
      $region57: #{tpu_custom_call.1} parent=55 // pred_check
        %p1656 = pneg %p208
      $region58: #{tpu_custom_call.1} parent=55 // pred_check_branch
        %1658 = sbr.rel (%p1656) target = $region60
      $region59: #{tpu_custom_call.1} parent=55 // pred_region
        %s1659 = smul.u32 8, %s25
        %p1660 = scmp.lt.s32.totalorder %s24, 1
        %s1661 = scalar_select %p1660, %s24, 1
        %p1662 = scmp.lt.s32.totalorder %s1659, 15
        %s1663 = scalar_select %p1662, %s1659, 15
        %s1664 = smul.addr %s1663, 2
        %s1665 = smul.addr %s1661, 32
        %s1666 = sadd.s32 %s1664, %s1665
        %s1667 = smul.addr %s1666, 8
        %s1668 = scalar_lea.vmem %s7, %s1667
      $region60: #{tpu_custom_call.1} parent=55 // pred_fallthru
        _
    $region56: #{tpu_custom_call.1} parent=5 // pred_fallthru
      _
  $region6: #{tpu_custom_call.1} parent=0 // loop_footer
    %s17 = sadd.s32 1, %s13
  $region7: #{tpu_custom_call.1} parent=0 // loop_footer_branch
    %12 = sbr.rel target = $region3
  $region8: #{tpu_custom_call.1} parent=0 // loop_exit
    _

</llo_original>
